<compile_context>
chip_gen: v7x
topology: tpu7x:2x2x1
jax: 0.10.0
libtpu: 0.0.40
codegen_flags: <defaults>
</compile_context>

<pallas_src>
import math
import functools

import jax
import jax.numpy as jnp
from jax import lax
from jax.experimental import pallas as pl
from jax.experimental.pallas import tpu as pltpu


# MXU operand dtype.  Weights are cast to this ONCE at pack time (host side);
# activations are cast at each jnp.dot; accumulation is always float32.
MXU_DTYPE = jnp.bfloat16


# ------------------------------------------------------------------ kernel

def _decoder_layer_kernel(x_ref, w4_ref, b4_ref, wc_ref, bc_ref,
                          gamma_ref, beta_ref, w1_ref, b1_ref,
                          wm_ref, bm_ref, out_ref, carry_ref,
                          *, n_head, eps):
    """One grid step == one DecoderLayer (+ the final mlp Linear on the last
    step).  The running activation lives in `carry_ref` across grid steps."""
    layer = pl.program_id(0)
    n_layers = pl.num_programs(0)
    f32 = jnp.float32

    x0 = x_ref[...]                           # (L, F) original input (resident)
    L = x0.shape[0]
    H = wc_ref.shape[1]                       # h_feats
    d = H // n_head
    # PyTorch's ScaleDotProductAttention unpacks the post-split (L, d, n_head)
    # tensor as (head, length, d_tensor), so it scales by sqrt(n_head) and runs
    # softmax over the head-dim (d) axis.  Faithful quirk, shared with the ref.
    scale = 1.0 / math.sqrt(n_head)

    def mm(a, w):                             # MXU matmul, f32 accumulation
        return jnp.dot(a.astype(w.dtype), w, preferred_element_type=f32)

    @pl.when(layer == 0)
    def _():
        carry_ref[...] = x0

    x = carry_ref[...]                        # (L, F) running activation, f32

    # --- fused lane-dense projection: [ q | k | v | residual linear ] --------
    proj = mm(x, w4_ref[0]) + b4_ref[0]       # (L, 4H) f32

    # --- ScaleDotProductAttention (contraction over heads, softmax over d) ---
    score = jnp.zeros((L, d, d), f32)
    for h in range(n_head):                   # static n_head unroll, all f32
        q_h = proj[:, h * d:(h + 1) * d]                  # (L, d)
        k_h = proj[:, H + h * d:H + (h + 1) * d]          # (L, d)
        score = score + q_h[:, :, None] * k_h[:, None, :]
    score = score * scale
    score = score - jnp.max(score, axis=-1, keepdims=True)
    e = jnp.exp(score)
    inv = pl.reciprocal(jnp.sum(e, axis=-1, keepdims=True), approx=True)  # EUP
    p = e * inv                                            # softmax, (L, d, d)

    heads = []
    for h in range(n_head):
        v_h = proj[:, 2 * H + h * d:2 * H + (h + 1) * d]   # (L, d)
        heads.append(jnp.sum(p * v_h[:, None, :], axis=-1))
    # concat(heads) reproduces MultiHeadAttention.concat()'s column order,
    # then one full-K MXU matmul against w_concat.
    att = mm(jnp.concatenate(heads, axis=1), wc_ref[0]) + bc_ref[0]

    # dropout1 has p=0.0 in Decoder -> identity.

    # --- LayerNorm(attention + linear(_x)); single-pass sum / sum-of-squares -
    res = proj[:, 3 * H:4 * H]                             # residual linear
    y = att + res
    s1 = jnp.sum(y, axis=-1, keepdims=True)
    s2 = jnp.sum(y * y, axis=-1, keepdims=True)
    mean = s1 * (1.0 / H)
    var = jnp.maximum(s2 * (1.0 / H) - mean * mean, 0.0)   # biased variance
    y = (y - mean) * lax.rsqrt(var + eps)                  # EUP rsqrt
    y = gamma_ref[0] * y + beta_ref[0]

    # --- linear1 back to in_feats + Decoder-level residual against x0 --------
    new_x = mm(y, w1_ref[0]) + b1_ref[0] + x0
    carry_ref[...] = new_x

    # --- final mlp Linear on the last layer step; lane-dense (padded) store --
    @pl.when(layer == n_layers - 1)
    def _():
        out_ref[...] = (mm(new_x, wm_ref[...]) + bm_ref[...]).astype(out_ref.dtype)


# ------------------------------------------------------------------ packing

def pack_params(params, mxu_dtype=MXU_DTYPE, lane_pad=128):
    """Host-side, ONCE per model (not per forward call):
      * stacks per-layer weights along a leading layer axis,
      * fuses the four input projections (q | k | v | residual linear) into one
        lane-dense (in_feats, 4*h_feats) weight + (1, 4*h_feats) bias per layer,
      * casts matmul weights to the MXU dtype (halves weight DMA bytes),
      * zero-pads the final mlp weight/bias to a 128-lane multiple so the
        kernel's output store is unmasked."""
    layers = params['layers']
    wcast = lambda a: a.astype(mxu_dtype)
    stack_w = lambda key: jnp.stack([wcast(lp[key]) for lp in layers])
    stack_b = lambda key: jnp.stack([lp[key] for lp in layers])
    w4 = jnp.stack([wcast(jnp.concatenate(
        [lp['wq'], lp['wk'], lp['wv'], lp['wl']], axis=1)) for lp in layers])
    b4 = jnp.stack([jnp.concatenate(
        [lp['bq'], lp['bk'], lp['bv'], lp['bl']], axis=1) for lp in layers])
    h_feats = params['mlp_w'].shape[1]
    hp = ((h_feats + lane_pad - 1) // lane_pad) * lane_pad
    wm = wcast(jnp.pad(params['mlp_w'], ((0, 0), (0, hp - h_feats))))
    bm = jnp.pad(params['mlp_b'], ((0, 0), (0, hp - h_feats)))
    return (w4, b4, stack_w('wc'), stack_b('bc'),
            stack_b('gamma'), stack_b('beta'),
            stack_w('w1'), stack_b('b1'), wm, bm)


# ------------------------------------------------------------------ wrapper

@functools.partial(jax.jit, static_argnums=(3, 4))
def decoder_forward(x, edge_index, packed, n_head, h_feats):
    del edge_index                            # unused by the PyTorch forward too
    w4, b4, wc, bc, gamma, beta, w1, b1, wm, bm = packed
    n_layers, in_feats, h4 = w4.shape
    L = x.shape[0]
    H = wc.shape[1]
    HP = wm.shape[1]                          # lane-padded final output width
    d = H // n_head

    # Advisory cost model so XLA schedules around the custom call.
    flops = int(n_layers * (2 * L * in_feats * h4        # fused projection
                            + 4 * L * d * d * n_head     # score + p@v
                            + 2 * L * H * H              # w_concat
                            + 2 * L * H * in_feats       # linear1
                            + 16 * L * H)                # softmax / LayerNorm
                + 2 * L * in_feats * HP)                 # final mlp
    transcendentals = int(n_layers * (L * d * d + 2 * L * d))
    bytes_accessed = int(x.size * x.dtype.itemsize
                         + sum(a.size * a.dtype.itemsize for a in packed)
                         + L * HP * 4)

    layer_spec = lambda *dims: pl.BlockSpec((1,) + dims, lambda l: (l, 0, 0))
    const_spec = lambda *dims: pl.BlockSpec(dims, lambda l: (0, 0))

    kern = functools.partial(_decoder_layer_kernel, n_head=n_head, eps=1e-12)
    out = pl.pallas_call(
        kern,
        out_shape=jax.ShapeDtypeStruct((L, HP), jnp.float32),
        grid_spec=pltpu.PrefetchScalarGridSpec(
            num_scalar_prefetch=0,
            grid=(n_layers,),
            in_specs=[
                const_spec(L, in_feats),      # x (fetched once, stays resident)
                layer_spec(in_feats, h4),     # fused [q|k|v|linear] weight, bf16
                layer_spec(1, h4),            # fused bias, f32
                layer_spec(H, H),             # w_concat, bf16
                layer_spec(1, H),             # b_concat
                layer_spec(1, H),             # LayerNorm gamma
                layer_spec(1, H),             # LayerNorm beta
                layer_spec(H, in_feats),      # linear1 weight, bf16
                layer_spec(1, in_feats),      # linear1 bias
                const_spec(in_feats, HP),     # final mlp weight (lane-padded)
                const_spec(1, HP),            # final mlp bias (lane-padded)
            ],
            out_specs=pl.BlockSpec((L, HP), lambda l: (0, 0)),
            scratch_shapes=[pltpu.VMEM((L, in_feats), jnp.float32)],
        ),
        compiler_params=pltpu.CompilerParams(
            dimension_semantics=("arbitrary",)),
        cost_estimate=pl.CostEstimate(flops=flops,
                                      transcendentals=transcendentals,
                                      bytes_accessed=bytes_accessed),
    )(x, w4, b4, wc, bc, gamma, beta, w1, b1, wm, bm)
    return out[:, :h_feats]


# ------------------------------------------------------------------ params

def _init_linear(key, fan_in, fan_out):
    # PyTorch Linear(fan_in, fan_out): weight (fan_out, fan_in), bias (fan_out,)
    # stored kernel-ready: W transposed to (fan_in, fan_out), bias (1, fan_out).
    kw, kb = jax.random.split(key)
    bound = 1.0 / math.sqrt(fan_in)
    W = jax.random.uniform(kw, (fan_in, fan_out), jnp.float32, -bound, bound)
    b = jax.random.uniform(kb, (1, fan_out), jnp.float32, -bound, bound)
    return W, b


def init_params(key, in_feats, h_feats, n_head, n_layers):
    assert h_feats % n_head == 0
    layers = []
    keys = jax.random.split(key, n_layers + 1)
    for i in range(n_layers):
        ks = jax.random.split(keys[i], 6)
        wq, bq = _init_linear(ks[0], in_feats, h_feats)
        wk, bk = _init_linear(ks[1], in_feats, h_feats)
        wv, bv = _init_linear(ks[2], in_feats, h_feats)
        wc, bc = _init_linear(ks[3], h_feats, h_feats)
        wl, bl = _init_linear(ks[4], in_feats, h_feats)   # self.linear
        w1, b1 = _init_linear(ks[5], h_feats, in_feats)   # self.linear1
        layers.append(dict(
            wq=wq, bq=bq, wk=wk, bk=bk, wv=wv, bv=bv, wc=wc, bc=bc,
            wl=wl, bl=bl, w1=w1, b1=b1,
            gamma=jnp.ones((1, h_feats), jnp.float32),    # LayerNorm init
            beta=jnp.zeros((1, h_feats), jnp.float32),
        ))
        # norm3 exists in __init__ but is unused in forward -> not materialized.
    mlp_w, mlp_b = _init_linear(keys[-1], in_feats, h_feats)
    return dict(layers=layers, mlp_w=mlp_w, mlp_b=mlp_b)


# ------------------------------------------------------------------ pure-JAX reference

def _mm_ref(a, w):
    """Reference matmul with the kernel's MXU-dtype discipline: bf16 operands,
    f32 accumulation (weights rounded exactly as pack_params rounds them)."""
    return jnp.dot(a.astype(MXU_DTYPE), w.astype(MXU_DTYPE),
                   preferred_element_type=jnp.float32)


def _ref_attention(q, k, v, n_head):
    L, H = q.shape
    d = H // n_head
    q3 = q.reshape(L, n_head, d).transpose(0, 2, 1)   # split(): (L, d, n_head)
    k3 = k.reshape(L, n_head, d).transpose(0, 2, 1)
    v3 = v.reshape(L, n_head, d).transpose(0, 2, 1)
    score = jnp.einsum('lih,ljh->lij', q3, k3) / math.sqrt(n_head)
    score = jax.nn.softmax(score, axis=-1)
    out3 = jnp.einsum('lij,ljh->lih', score, v3)       # (L, d, n_head)
    return out3.transpose(0, 2, 1).reshape(L, H)       # concat()


def ref_decoder(x, params, n_head, eps=1e-12):
    x0 = x
    for p in params['layers']:
        q = _mm_ref(x, p['wq']) + p['bq']
        k = _mm_ref(x, p['wk']) + p['bk']
        v = _mm_ref(x, p['wv']) + p['bv']
        att = _mm_ref(_ref_attention(q, k, v, n_head), p['wc']) + p['bc']
        res = _mm_ref(x, p['wl']) + p['bl']
        y = att + res
        mean = y.mean(-1, keepdims=True)
        var = ((y - mean) ** 2).mean(-1, keepdims=True)
        y = p['gamma'] * (y - mean) / jnp.sqrt(var + eps) + p['beta']
        x = _mm_ref(y, p['w1']) + p['b1'] + x0
    return _mm_ref(x, params['mlp_w']) + params['mlp_b']


# ------------------------------------------------------------------ main

if __name__ == "__main__":
    L, in_feats, h_feats, n_head, n_layers = 8, 32, 32, 4, 2

    key = jax.random.PRNGKey(0)
    kx, kp = jax.random.split(key)
    x = jax.random.normal(kx, (L, in_feats), jnp.float32)
    edge_index = jnp.zeros((2, 4), jnp.int32)   # unused by the forward pass

    params = init_params(kp, in_feats, h_feats, n_head, n_layers)

    # Pack / cast / stack weights ONCE, outside the jitted per-call path.
    packed = jax.block_until_ready(pack_params(params))

    out = decoder_forward(x, edge_index, packed, n_head, h_feats)
    out = jax.block_until_ready(out)

    ref = ref_decoder(x, params, n_head)
    assert out.shape == (L, h_feats), out.shape
    err = float(jnp.max(jnp.abs(out - ref)))
    # Reference uses the same bf16-rounded weights and bf16 MXU operands with
    # f32 accumulation, so the only kernel-vs-reference delta is the EUP
    # approximate reciprocal in the softmax denominator (propagated through
    # both layers this stays well under 5e-3 even for a conservative 2^-8
    # reciprocal error) plus f32 summation-order noise.
    assert err < 5e-3, err

    print("KERNEL_OK")
</pallas_src>

<mosaic_0001>
module attributes {stable_mosaic.version = 11 : i64} {
  func.func @_decoder_layer_kernel(%arg0: i32, %arg1: memref<8x32xf32, #tpu.memory_space<vmem>>, %arg2: memref<1x32x128xbf16, #tpu.memory_space<vmem>>, %arg3: memref<1x1x128xf32, #tpu.memory_space<vmem>>, %arg4: memref<1x32x32xbf16, #tpu.memory_space<vmem>>, %arg5: memref<1x1x32xf32, #tpu.memory_space<vmem>>, %arg6: memref<1x1x32xf32, #tpu.memory_space<vmem>>, %arg7: memref<1x1x32xf32, #tpu.memory_space<vmem>>, %arg8: memref<1x32x32xbf16, #tpu.memory_space<vmem>>, %arg9: memref<1x1x32xf32, #tpu.memory_space<vmem>>, %arg10: memref<32x128xbf16, #tpu.memory_space<vmem>>, %arg11: memref<1x128xf32, #tpu.memory_space<vmem>>, %arg12: memref<8x128xf32, #tpu.memory_space<vmem>>, %arg13: memref<8x32xf32, #tpu.memory_space<vmem>>) attributes {dimension_semantics = [#tpu.dimension_semantics<arbitrary>], iteration_bounds = array<i64: 2>, scalar_prefetch = 0 : i64, scratch_operands = 1 : i64, tpu.core_type = #tpu.core_type<tc>, window_params = [{pipeline_mode = #tpu.pipeline_mode<synchronous>, transform_indices = @transform_0, window_bounds = array<i64: 8, 32>}, {transform_indices = @transform_1, window_bounds = array<i64: 1, 32, 128>}, {transform_indices = @transform_2, window_bounds = array<i64: 1, 1, 128>}, {transform_indices = @transform_3, window_bounds = array<i64: 1, 32, 32>}, {transform_indices = @transform_4, window_bounds = array<i64: 1, 1, 32>}, {transform_indices = @transform_5, window_bounds = array<i64: 1, 1, 32>}, {transform_indices = @transform_6, window_bounds = array<i64: 1, 1, 32>}, {transform_indices = @transform_7, window_bounds = array<i64: 1, 32, 32>}, {transform_indices = @transform_8, window_bounds = array<i64: 1, 1, 32>}, {pipeline_mode = #tpu.pipeline_mode<synchronous>, transform_indices = @transform_9, window_bounds = array<i64: 32, 128>}, {pipeline_mode = #tpu.pipeline_mode<synchronous>, transform_indices = @transform_10, window_bounds = array<i64: 1, 128>}, {pipeline_mode = #tpu.pipeline_mode<synchronous>, transform_indices = @transform_11, window_bounds = array<i64: 8, 128>}]} {
    %c0 = arith.constant 0 : index
    %c0_0 = arith.constant 0 : index
    %0 = vector.load %arg1[%c0, %c0_0] : memref<8x32xf32, #tpu.memory_space<vmem>>, vector<8x32xf32>
    %c0_i32 = arith.constant 0 : i32
    %1 = arith.cmpi eq, %arg0, %c0_i32 : i32
    %2 = arith.extui %1 : i1 to i32
    %c0_i32_1 = arith.constant 0 : i32
    %3 = arith.cmpi ne, %2, %c0_i32_1 : i32
    scf.if %3 {
      %c0_47 = arith.constant 0 : index
      %c0_48 = arith.constant 0 : index
      %130 = vector.load %arg13[%c0_47, %c0_48] : memref<8x32xf32, #tpu.memory_space<vmem>>, vector<8x32xf32>
      tpu.vector_store %arg13[%c0_47, %c0_48], %0 {strides = array<i32>} : memref<8x32xf32, #tpu.memory_space<vmem>>, vector<8x32xf32>,
    } else {
    }
    %c0_2 = arith.constant 0 : index
    %c0_3 = arith.constant 0 : index
    %4 = vector.load %arg13[%c0_2, %c0_3] : memref<8x32xf32, #tpu.memory_space<vmem>>, vector<8x32xf32>
    %c0_4 = arith.constant 0 : index
    %c0_5 = arith.constant 0 : index
    %c0_6 = arith.constant 0 : index
    %5 = vector.load %arg2[%c0_4, %c0_5, %c0_6] : memref<1x32x128xbf16, #tpu.memory_space<vmem>>, vector<1x32x128xbf16>
    %6 = vector.shape_cast %5 : vector<1x32x128xbf16> to vector<32x128xbf16>
    %7 = arith.truncf %4 : vector<8x32xf32> to vector<8x32xbf16>
    %cst = arith.constant dense<0.000000e+00> : vector<8x128xf32>
    %8 = tpu.matmul %7, %6, %cst {dimension_numbers = #tpu.dot_dimension_numbers<[1], [0], [0], [1], [0, 0, 1, 1], [], []>} : vector<8x32xbf16>, vector<32x128xbf16>, vector<8x128xf32> -> vector<8x128xf32>
    %c0_7 = arith.constant 0 : index
    %c0_8 = arith.constant 0 : index
    %c0_9 = arith.constant 0 : index
    %9 = vector.load %arg3[%c0_7, %c0_8, %c0_9] : memref<1x1x128xf32, #tpu.memory_space<vmem>>, vector<1x1x128xf32>
    %10 = vector.shape_cast %9 : vector<1x1x128xf32> to vector<1x128xf32>
    %11 = vector.broadcast %10 : vector<1x128xf32> to vector<8x128xf32>
    %12 = arith.addf %8, %11 : vector<8x128xf32>
    %cst_10 = arith.constant 0.000000e+00 : f32
    %13 = vector.broadcast %cst_10 : f32 to vector<8x8x8xf32>
    %14 = vector.extract_strided_slice %12 {offsets = [0, 0], sizes = [8, 8], strides = [1, 1]} : vector<8x128xf32> to vector<8x8xf32>
    %15 = vector.extract_strided_slice %12 {offsets = [0, 32], sizes = [8, 8], strides = [1, 1]} : vector<8x128xf32> to vector<8x8xf32>
    %16 = vector.shape_cast %14 : vector<8x8xf32> to vector<8x8x1xf32>
    %17 = vector.shape_cast %15 : vector<8x8xf32> to vector<8x1x8xf32>
    %18 = vector.broadcast %16 : vector<8x8x1xf32> to vector<8x8x8xf32>
    %19 = vector.broadcast %17 : vector<8x1x8xf32> to vector<8x8x8xf32>
    %20 = arith.mulf %18, %19 : vector<8x8x8xf32>
    %21 = arith.addf %13, %20 : vector<8x8x8xf32>
    %22 = vector.extract_strided_slice %12 {offsets = [0, 8], sizes = [8, 8], strides = [1, 1]} : vector<8x128xf32> to vector<8x8xf32>
    %23 = vector.extract_strided_slice %12 {offsets = [0, 40], sizes = [8, 8], strides = [1, 1]} : vector<8x128xf32> to vector<8x8xf32>
    %24 = vector.shape_cast %22 : vector<8x8xf32> to vector<8x8x1xf32>
    %25 = vector.shape_cast %23 : vector<8x8xf32> to vector<8x1x8xf32>
    %26 = vector.broadcast %24 : vector<8x8x1xf32> to vector<8x8x8xf32>
    %27 = vector.broadcast %25 : vector<8x1x8xf32> to vector<8x8x8xf32>
    %28 = arith.mulf %26, %27 : vector<8x8x8xf32>
    %29 = arith.addf %21, %28 : vector<8x8x8xf32>
    %30 = vector.extract_strided_slice %12 {offsets = [0, 16], sizes = [8, 8], strides = [1, 1]} : vector<8x128xf32> to vector<8x8xf32>
    %31 = vector.extract_strided_slice %12 {offsets = [0, 48], sizes = [8, 8], strides = [1, 1]} : vector<8x128xf32> to vector<8x8xf32>
    %32 = vector.shape_cast %30 : vector<8x8xf32> to vector<8x8x1xf32>
    %33 = vector.shape_cast %31 : vector<8x8xf32> to vector<8x1x8xf32>
    %34 = vector.broadcast %32 : vector<8x8x1xf32> to vector<8x8x8xf32>
    %35 = vector.broadcast %33 : vector<8x1x8xf32> to vector<8x8x8xf32>
    %36 = arith.mulf %34, %35 : vector<8x8x8xf32>
    %37 = arith.addf %29, %36 : vector<8x8x8xf32>
    %38 = vector.extract_strided_slice %12 {offsets = [0, 24], sizes = [8, 8], strides = [1, 1]} : vector<8x128xf32> to vector<8x8xf32>
    %39 = vector.extract_strided_slice %12 {offsets = [0, 56], sizes = [8, 8], strides = [1, 1]} : vector<8x128xf32> to vector<8x8xf32>
    %40 = vector.shape_cast %38 : vector<8x8xf32> to vector<8x8x1xf32>
    %41 = vector.shape_cast %39 : vector<8x8xf32> to vector<8x1x8xf32>
    %42 = vector.broadcast %40 : vector<8x8x1xf32> to vector<8x8x8xf32>
    %43 = vector.broadcast %41 : vector<8x1x8xf32> to vector<8x8x8xf32>
    %44 = arith.mulf %42, %43 : vector<8x8x8xf32>
    %45 = arith.addf %37, %44 : vector<8x8x8xf32>
    %cst_11 = arith.constant 5.000000e-01 : f32
    %46 = vector.broadcast %cst_11 : f32 to vector<8x8x8xf32>
    %47 = arith.mulf %45, %46 : vector<8x8x8xf32>
    %cst_12 = arith.constant dense<0xFF800000> : vector<8x8xf32>
    %48 = vector.multi_reduction <maximumf>, %47, %cst_12 [2] : vector<8x8x8xf32> to vector<8x8xf32>
    %49 = vector.shape_cast %48 : vector<8x8xf32> to vector<8x8x1xf32>
    %50 = vector.broadcast %49 : vector<8x8x1xf32> to vector<8x8x8xf32>
    %51 = arith.subf %47, %50 : vector<8x8x8xf32>
    %52 = math.exp %51 : vector<8x8x8xf32>
    %cst_13 = arith.constant dense<0.000000e+00> : vector<8x8xf32>
    %53 = vector.multi_reduction <add>, %52, %cst_13 [2] : vector<8x8x8xf32> to vector<8x8xf32>
    %54 = vector.shape_cast %53 : vector<8x8xf32> to vector<8x8x1xf32>
    %55 = tpu.reciprocal %54 {approx = true} : vector<8x8x1xf32> -> vector<8x8x1xf32>
    %56 = vector.broadcast %55 : vector<8x8x1xf32> to vector<8x8x8xf32>
    %57 = arith.mulf %52, %56 : vector<8x8x8xf32>
    %58 = vector.extract_strided_slice %12 {offsets = [0, 64], sizes = [8, 8], strides = [1, 1]} : vector<8x128xf32> to vector<8x8xf32>
    %59 = vector.shape_cast %58 : vector<8x8xf32> to vector<8x1x8xf32>
    %60 = vector.broadcast %59 : vector<8x1x8xf32> to vector<8x8x8xf32>
    %61 = arith.mulf %57, %60 : vector<8x8x8xf32>
    %cst_14 = arith.constant dense<0.000000e+00> : vector<8x8xf32>
    %62 = vector.multi_reduction <add>, %61, %cst_14 [2] : vector<8x8x8xf32> to vector<8x8xf32>
    %63 = vector.extract_strided_slice %12 {offsets = [0, 72], sizes = [8, 8], strides = [1, 1]} : vector<8x128xf32> to vector<8x8xf32>
    %64 = vector.shape_cast %63 : vector<8x8xf32> to vector<8x1x8xf32>
    %65 = vector.broadcast %64 : vector<8x1x8xf32> to vector<8x8x8xf32>
    %66 = arith.mulf %57, %65 : vector<8x8x8xf32>
    %cst_15 = arith.constant dense<0.000000e+00> : vector<8x8xf32>
    %67 = vector.multi_reduction <add>, %66, %cst_15 [2] : vector<8x8x8xf32> to vector<8x8xf32>
    %68 = vector.extract_strided_slice %12 {offsets = [0, 80], sizes = [8, 8], strides = [1, 1]} : vector<8x128xf32> to vector<8x8xf32>
    %69 = vector.shape_cast %68 : vector<8x8xf32> to vector<8x1x8xf32>
    %70 = vector.broadcast %69 : vector<8x1x8xf32> to vector<8x8x8xf32>
    %71 = arith.mulf %57, %70 : vector<8x8x8xf32>
    %cst_16 = arith.constant dense<0.000000e+00> : vector<8x8xf32>
    %72 = vector.multi_reduction <add>, %71, %cst_16 [2] : vector<8x8x8xf32> to vector<8x8xf32>
    %73 = vector.extract_strided_slice %12 {offsets = [0, 88], sizes = [8, 8], strides = [1, 1]} : vector<8x128xf32> to vector<8x8xf32>
    %74 = vector.shape_cast %73 : vector<8x8xf32> to vector<8x1x8xf32>
    %75 = vector.broadcast %74 : vector<8x1x8xf32> to vector<8x8x8xf32>
    %76 = arith.mulf %57, %75 : vector<8x8x8xf32>
    %cst_17 = arith.constant dense<0.000000e+00> : vector<8x8xf32>
    %77 = vector.multi_reduction <add>, %76, %cst_17 [2] : vector<8x8x8xf32> to vector<8x8xf32>
    %78 = tpu.concatenate %62, %67, %72, %77 in 1 : vector<8x8xf32>, vector<8x8xf32>, vector<8x8xf32>, vector<8x8xf32> -> vector<8x32xf32>
    %c0_18 = arith.constant 0 : index
    %c0_19 = arith.constant 0 : index
    %c0_20 = arith.constant 0 : index
    %79 = vector.load %arg4[%c0_18, %c0_19, %c0_20] : memref<1x32x32xbf16, #tpu.memory_space<vmem>>, vector<1x32x32xbf16>
    %80 = vector.shape_cast %79 : vector<1x32x32xbf16> to vector<32x32xbf16>
    %81 = arith.truncf %78 : vector<8x32xf32> to vector<8x32xbf16>
    %cst_21 = arith.constant dense<0.000000e+00> : vector<8x32xf32>
    %82 = tpu.matmul %81, %80, %cst_21 {dimension_numbers = #tpu.dot_dimension_numbers<[1], [0], [0], [1], [0, 0, 1, 1], [], []>} : vector<8x32xbf16>, vector<32x32xbf16>, vector<8x32xf32> -> vector<8x32xf32>
    %c0_22 = arith.constant 0 : index
    %c0_23 = arith.constant 0 : index
    %c0_24 = arith.constant 0 : index
    %83 = vector.load %arg5[%c0_22, %c0_23, %c0_24] : memref<1x1x32xf32, #tpu.memory_space<vmem>>, vector<1x1x32xf32>
    %84 = vector.shape_cast %83 : vector<1x1x32xf32> to vector<1x32xf32>
    %85 = vector.broadcast %84 : vector<1x32xf32> to vector<8x32xf32>
    %86 = arith.addf %82, %85 : vector<8x32xf32>
    %87 = vector.extract_strided_slice %12 {offsets = [0, 96], sizes = [8, 32], strides = [1, 1]} : vector<8x128xf32> to vector<8x32xf32>
    %88 = arith.addf %86, %87 : vector<8x32xf32>
    %cst_25 = arith.constant dense<0.000000e+00> : vector<8xf32>
    %89 = vector.multi_reduction <add>, %88, %cst_25 [1] : vector<8x32xf32> to vector<8xf32>
    %90 = vector.shape_cast %89 : vector<8xf32> to vector<8x1xf32>
    %91 = arith.mulf %88, %88 : vector<8x32xf32>
    %cst_26 = arith.constant dense<0.000000e+00> : vector<8xf32>
    %92 = vector.multi_reduction <add>, %91, %cst_26 [1] : vector<8x32xf32> to vector<8xf32>
    %93 = vector.shape_cast %92 : vector<8xf32> to vector<8x1xf32>
    %cst_27 = arith.constant 3.125000e-02 : f32
    %94 = vector.broadcast %cst_27 : f32 to vector<8x1xf32>
    %95 = arith.mulf %90, %94 : vector<8x1xf32>
    %cst_28 = arith.constant 3.125000e-02 : f32
    %96 = vector.broadcast %cst_28 : f32 to vector<8x1xf32>
    %97 = arith.mulf %93, %96 : vector<8x1xf32>
    %98 = arith.mulf %95, %95 : vector<8x1xf32>
    %99 = arith.subf %97, %98 : vector<8x1xf32>
    %cst_29 = arith.constant 0.000000e+00 : f32
    %100 = vector.broadcast %cst_29 : f32 to vector<8x1xf32>
    %101 = arith.maximumf %99, %100 : vector<8x1xf32>
    %102 = vector.broadcast %95 : vector<8x1xf32> to vector<8x32xf32>
    %103 = arith.subf %88, %102 : vector<8x32xf32>
    %cst_30 = arith.constant 9.99999996E-13 : f32
    %104 = vector.broadcast %cst_30 : f32 to vector<8x1xf32>
    %105 = arith.addf %101, %104 : vector<8x1xf32>
    %106 = math.rsqrt %105 : vector<8x1xf32>
    %107 = vector.broadcast %106 : vector<8x1xf32> to vector<8x32xf32>
    %108 = arith.mulf %103, %107 : vector<8x32xf32>
    %c0_31 = arith.constant 0 : index
    %c0_32 = arith.constant 0 : index
    %c0_33 = arith.constant 0 : index
    %109 = vector.load %arg6[%c0_31, %c0_32, %c0_33] : memref<1x1x32xf32, #tpu.memory_space<vmem>>, vector<1x1x32xf32>
    %110 = vector.shape_cast %109 : vector<1x1x32xf32> to vector<1x32xf32>
    %111 = vector.broadcast %110 : vector<1x32xf32> to vector<8x32xf32>
    %112 = arith.mulf %111, %108 : vector<8x32xf32>
    %c0_34 = arith.constant 0 : index
    %c0_35 = arith.constant 0 : index
    %c0_36 = arith.constant 0 : index
    %113 = vector.load %arg7[%c0_34, %c0_35, %c0_36] : memref<1x1x32xf32, #tpu.memory_space<vmem>>, vector<1x1x32xf32>
    %114 = vector.shape_cast %113 : vector<1x1x32xf32> to vector<1x32xf32>
    %115 = vector.broadcast %114 : vector<1x32xf32> to vector<8x32xf32>
    %116 = arith.addf %112, %115 : vector<8x32xf32>
    %c0_37 = arith.constant 0 : index
    %c0_38 = arith.constant 0 : index
    %c0_39 = arith.constant 0 : index
    %117 = vector.load %arg8[%c0_37, %c0_38, %c0_39] : memref<1x32x32xbf16, #tpu.memory_space<vmem>>, vector<1x32x32xbf16>
    %118 = vector.shape_cast %117 : vector<1x32x32xbf16> to vector<32x32xbf16>
    %119 = arith.truncf %116 : vector<8x32xf32> to vector<8x32xbf16>
    %cst_40 = arith.constant dense<0.000000e+00> : vector<8x32xf32>
    %120 = tpu.matmul %119, %118, %cst_40 {dimension_numbers = #tpu.dot_dimension_numbers<[1], [0], [0], [1], [0, 0, 1, 1], [], []>} : vector<8x32xbf16>, vector<32x32xbf16>, vector<8x32xf32> -> vector<8x32xf32>
    %c0_41 = arith.constant 0 : index
    %c0_42 = arith.constant 0 : index
    %c0_43 = arith.constant 0 : index
    %121 = vector.load %arg9[%c0_41, %c0_42, %c0_43] : memref<1x1x32xf32, #tpu.memory_space<vmem>>, vector<1x1x32xf32>
    %122 = vector.shape_cast %121 : vector<1x1x32xf32> to vector<1x32xf32>
    %123 = vector.broadcast %122 : vector<1x32xf32> to vector<8x32xf32>
    %124 = arith.addf %120, %123 : vector<8x32xf32>
    %125 = arith.addf %124, %0 : vector<8x32xf32>
    %c0_44 = arith.constant 0 : index
    %c0_45 = arith.constant 0 : index
    %126 = vector.load %arg13[%c0_44, %c0_45] : memref<8x32xf32, #tpu.memory_space<vmem>>, vector<8x32xf32>
    tpu.vector_store %arg13[%c0_44, %c0_45], %125 {strides = array<i32>} : memref<8x32xf32, #tpu.memory_space<vmem>>, vector<8x32xf32>,
    %c1_i32 = arith.constant 1 : i32
    %127 = arith.cmpi eq, %arg0, %c1_i32 : i32
    %128 = arith.extui %127 : i1 to i32
    %c0_i32_46 = arith.constant 0 : i32
    %129 = arith.cmpi ne, %128, %c0_i32_46 : i32
    scf.if %129 {
      %c0_47 = arith.constant 0 : index
      %c0_48 = arith.constant 0 : index
      %130 = vector.load %arg10[%c0_47, %c0_48] : memref<32x128xbf16, #tpu.memory_space<vmem>>, vector<32x128xbf16>
      %131 = arith.truncf %125 : vector<8x32xf32> to vector<8x32xbf16>
      %cst_49 = arith.constant dense<0.000000e+00> : vector<8x128xf32>
      %132 = tpu.matmul %131, %130, %cst_49 {dimension_numbers = #tpu.dot_dimension_numbers<[1], [0], [0], [1], [0, 0, 1, 1], [], []>} : vector<8x32xbf16>, vector<32x128xbf16>, vector<8x128xf32> -> vector<8x128xf32>
      %c0_50 = arith.constant 0 : index
      %c0_51 = arith.constant 0 : index
      %133 = vector.load %arg11[%c0_50, %c0_51] : memref<1x128xf32, #tpu.memory_space<vmem>>, vector<1x128xf32>
      %134 = vector.broadcast %133 : vector<1x128xf32> to vector<8x128xf32>
      %135 = arith.addf %132, %134 : vector<8x128xf32>
      %c0_52 = arith.constant 0 : index
      %c0_53 = arith.constant 0 : index
      %136 = vector.load %arg12[%c0_52, %c0_53] : memref<8x128xf32, #tpu.memory_space<vmem>>, vector<8x128xf32>
      tpu.vector_store %arg12[%c0_52, %c0_53], %135 {strides = array<i32>} : memref<8x128xf32, #tpu.memory_space<vmem>>, vector<8x128xf32>,
    } else {
    }
    return
  }
  func.func @transform_0(%arg0: i32) -> (i32, i32) {
    %c0_i32 = arith.constant 0 : i32
    %c0_i32_0 = arith.constant 0 : i32
    %c0_i32_1 = arith.constant 0 : i32
    return %c0_i32, %c0_i32_0 : i32, i32
  }
  func.func @transform_1(%arg0: i32) -> (i32, i32, i32) {
    %c0_i32 = arith.constant 0 : i32
    %c0_i32_0 = arith.constant 0 : i32
    %c0_i32_1 = arith.constant 0 : i32
    return %arg0, %c0_i32, %c0_i32_0 : i32, i32, i32
  }
  func.func @transform_2(%arg0: i32) -> (i32, i32, i32) {
    %c0_i32 = arith.constant 0 : i32
    %c0_i32_0 = arith.constant 0 : i32
    %c0_i32_1 = arith.constant 0 : i32
    return %arg0, %c0_i32, %c0_i32_0 : i32, i32, i32
  }
  func.func @transform_3(%arg0: i32) -> (i32, i32, i32) {
    %c0_i32 = arith.constant 0 : i32
    %c0_i32_0 = arith.constant 0 : i32
    %c0_i32_1 = arith.constant 0 : i32
    return %arg0, %c0_i32, %c0_i32_0 : i32, i32, i32
  }
  func.func @transform_4(%arg0: i32) -> (i32, i32, i32) {
    %c0_i32 = arith.constant 0 : i32
    %c0_i32_0 = arith.constant 0 : i32
    %c0_i32_1 = arith.constant 0 : i32
    return %arg0, %c0_i32, %c0_i32_0 : i32, i32, i32
  }
  func.func @transform_5(%arg0: i32) -> (i32, i32, i32) {
    %c0_i32 = arith.constant 0 : i32
    %c0_i32_0 = arith.constant 0 : i32
    %c0_i32_1 = arith.constant 0 : i32
    return %arg0, %c0_i32, %c0_i32_0 : i32, i32, i32
  }
  func.func @transform_6(%arg0: i32) -> (i32, i32, i32) {
    %c0_i32 = arith.constant 0 : i32
    %c0_i32_0 = arith.constant 0 : i32
    %c0_i32_1 = arith.constant 0 : i32
    return %arg0, %c0_i32, %c0_i32_0 : i32, i32, i32
  }
  func.func @transform_7(%arg0: i32) -> (i32, i32, i32) {
    %c0_i32 = arith.constant 0 : i32
    %c0_i32_0 = arith.constant 0 : i32
    %c0_i32_1 = arith.constant 0 : i32
    return %arg0, %c0_i32, %c0_i32_0 : i32, i32, i32
  }
  func.func @transform_8(%arg0: i32) -> (i32, i32, i32) {
    %c0_i32 = arith.constant 0 : i32
    %c0_i32_0 = arith.constant 0 : i32
    %c0_i32_1 = arith.constant 0 : i32
    return %arg0, %c0_i32, %c0_i32_0 : i32, i32, i32
  }
  func.func @transform_9(%arg0: i32) -> (i32, i32) {
    %c0_i32 = arith.constant 0 : i32
    %c0_i32_0 = arith.constant 0 : i32
    %c0_i32_1 = arith.constant 0 : i32
    return %c0_i32, %c0_i32_0 : i32, i32
  }
  func.func @transform_10(%arg0: i32) -> (i32, i32) {
    %c0_i32 = arith.constant 0 : i32
    %c0_i32_0 = arith.constant 0 : i32
    %c0_i32_1 = arith.constant 0 : i32
    return %c0_i32, %c0_i32_0 : i32, i32
  }
  func.func @transform_11(%arg0: i32) -> (i32, i32) {
    %c0_i32 = arith.constant 0 : i32
    %c0_i32_0 = arith.constant 0 : i32
    %c0_i32_1 = arith.constant 0 : i32
    return %c0_i32, %c0_i32_0 : i32, i32
  }
}

</mosaic_0001>

<llo_original>
// kernel: decoder_forward.1
$region0: #{decoder_forward.1}
  #allocation0 [shape = 'u32[]', space=smem, size = 0x4, offset = 0x4, fixed_abs, tag = 'smem constant byte address 0x4 - core index']
  #allocation1 [shape = 'u32[144,128]{1,0:T(1,128)}', space=vmem, size = 0x12000, scoped, tag = 'internal scratch']
  #allocation2 [shape = 'f32[8,32]{1,0:T(8,128)}', space=vmem, size = 0x1000, scoped, tag = 'scratch operand']
  %s0 = inlined_call_operand.hbm [shape: f32[8,32], index: 0, kind: input, shape index: {}]
  %s1 = inlined_call_operand.hbm [shape: bf16[2,32,128], index: 1, kind: input, shape index: {}]
  %s2 = inlined_call_operand.vmem [shape: f32[2,1,128], index: 2, kind: input, shape index: {}]
  %s3 = inlined_call_operand.hbm [shape: bf16[2,32,32], index: 3, kind: input, shape index: {}]
  %s4 = inlined_call_operand.vmem [shape: f32[2,1,32], index: 4, kind: input, shape index: {}]
  %s5 = inlined_call_operand.vmem [shape: f32[2,1,32], index: 5, kind: input, shape index: {}]
  %s6 = inlined_call_operand.vmem [shape: f32[2,1,32], index: 6, kind: input, shape index: {}]
  %s7 = inlined_call_operand.hbm [shape: bf16[2,32,32], index: 7, kind: input, shape index: {}]
  %s8 = inlined_call_operand.vmem [shape: f32[2,1,32], index: 8, kind: input, shape index: {}]
  %s9 = inlined_call_operand.vmem [shape: bf16[32,128], index: 9, kind: input, shape index: {}]
  %s10 = inlined_call_operand.vmem [shape: f32[1,128], index: 10, kind: input, shape index: {}]
  %s11 = inlined_call_operand.hbm [shape: f32[8,128], index: 11, kind: output, shape index: {}]
  %s12 = sld [smem:[#allocation0]]
  $region101: #{decoder_forward.1} parent=0
    _
  %s14 = ssub.s32 1, %s12
  %s15 = scalar_select 0, %s14, %s12
  $region1: #{decoder_forward.1} parent=0
    #allocation3 [shape = 'u8[4096]{0}', space=vmem, size = 0x1000, scoped, tag = 'input window, operand 0, single buffered']
    #allocation4 [shape = 's32[2]{0}', space=sflag, size = 0x8, scoped, tag = 'scoped memory for decoder_forward.1']
    #allocation5 [shape = 's32[2]{0}', space=sflag, size = 0x8, scoped, tag = 'scoped memory for decoder_forward.1']
    #allocation6 [shape = 'u8[16384]{0}', space=vmem, size = 0x4000, scoped, tag = 'input window, operand 1']
    #allocation7 [shape = 's32[2]{0}', space=sflag, size = 0x8, scoped, tag = 'scoped memory for decoder_forward.1']
    #allocation8 [shape = 'u8[16384]{0}', space=vmem, size = 0x4000, scoped, tag = 'input window, operand 3']
    #allocation9 [shape = 'u8[16384]{0}', space=vmem, size = 0x4000, scoped, tag = 'input window, operand 7']
    #allocation10 [shape = 's32[2]{0}', space=sflag, size = 0x8, scoped, tag = 'scoped memory for decoder_forward.1']
    #allocation11 [shape = 'u8[4096]{0}', space=vmem, size = 0x1000, scoped, tag = 'output window, operand 0, single buffered']
    %16 = vsyncpa [#allocation4], 0
    %17 = vsyncpa [#allocation7], 0
    %s18 = scalar_lea.sflag [#allocation7], 1
    %19 = vsyncpa %s18, 0
    %20 = vsyncpa [#allocation10], 0
    %s21 = scalar_lea.sflag [#allocation10], 1
    %22 = vsyncpa %s21, 0
    %23 = vsyncpa [#allocation5], 0
    loop: start=0, step=1, limit=4
    $region2: #{decoder_forward.1} parent=1 // loop_pre_header
      _
    $region3: #{decoder_forward.1} parent=1 // loop_header
      %s25 = sphi 0, %s29
      %p26 = scmp.ge.s32.totalorder %s25, 4
      %s33 = sphi 0, %s33
      %s35 = sphi 0, %s33
      %s36 = sphi 0, %s35
      %s50 = sphi 0, %s36
      %s56 = sphi 0, %s58
      %s59 = sphi 0, %s56
      %s60 = sphi 0, %s59
      %s76 = sphi 0, %s60
      %s82 = sphi 0, %s84
      %s85 = sphi 0, %s82
      %s86 = sphi 0, %s85
      %s102 = sphi 0, %s86
      %s108 = sphi 0, %s110
      %s111 = sphi 0, %s108
      %s112 = sphi 0, %s111
      %s128 = sphi 0, %s112
      %s134 = sphi 0, %s136
      %s137 = sphi 0, %s134
      %s138 = sphi 0, %s137
      %s154 = sphi 0, %s138
      %s160 = sphi 0, %s162
      %s163 = sphi 0, %s160
      %s164 = sphi 0, %s163
      %s180 = sphi 0, %s164
      %s186 = sphi 0, %s188
      %s189 = sphi 0, %s186
      %s190 = sphi 0, %s189
      %s206 = sphi 0, %s190
      %s212 = sphi 0, %s214
      %s215 = sphi 0, %s212
      %s216 = sphi 0, %s215
      %s232 = sphi 0, %s216
      %s238 = sphi 0, %s240
      %s241 = sphi 0, %s238
      %s242 = sphi 0, %s241
      %s258 = sphi 0, %s242
      %s262 = sphi 0, %s262
      %s264 = sphi 0, %s262
      %s265 = sphi 0, %s264
      %s279 = sphi 0, %s265
      %s283 = sphi 0, %s283
      %s285 = sphi 0, %s283
      %s286 = sphi 0, %s285
      %s300 = sphi 0, %s286
      %s304 = sphi 0, %s304
      %s306 = sphi 0, %s304
      %s307 = sphi 0, %s306
      %s321 = sphi 0, %s307
    $region4: #{decoder_forward.1} parent=1 // loop_header_branch
      %28 = sbr.rel (%p26) target = $region8
    $region5: #{decoder_forward.1} parent=1 // loop_body
      %s30 = ssub.s32 %s25, 1
      %s31 = ssub.s32 %s25, 2
      %s32 = sadd.s32 %s25, 1
      %s34 = sadd.s32 %s33, 1
      %p37 = scmp.eq.s32.totalorder %s25, 1
      %p38 = scmp.ne.s32.totalorder %s33, %s35
      %p39 = scmp.eq.s32.totalorder %s25, 0
      %p40 = por %p38, %p39
      %p41 = scmp.ne.s32.totalorder %s33, %s35
      %p42 = scmp.eq.s32.totalorder %s30, 1
      %p43 = por %p41, %p42
      %p44 = scmp.ne.s32.totalorder %s35, %s36
      %p45 = scmp.eq.s32.totalorder %s30, 0
      %p46 = por %p44, %p45
      %p47 = scmp.ne.s32.totalorder %s35, %s36
      %p48 = scmp.eq.s32.totalorder %s31, 1
      %p49 = por %p47, %p48
      %p51 = scmp.ne.s32.totalorder %s36, %s50
      %p52 = scmp.eq.s32.totalorder %s31, 0
      %p53 = por %p51, %p52
      %s54 = ssub.s32 %s25, %s32
      %p55 = scmp.eq.s32.totalorder %s54, 0
      %s57 = sadd.s32 %s56, 1
      %s58 = scalar_select %p55, %s56, %s57
      %p61 = pneg %p55
      %p62 = scmp.eq.s32.totalorder %s25, 1
      %p63 = por %p61, %p62
      %p64 = scmp.ne.s32.totalorder %s56, %s59
      %p65 = scmp.eq.s32.totalorder %s25, 0
      %p66 = por %p64, %p65
      %p67 = scmp.ne.s32.totalorder %s56, %s59
      %p68 = scmp.eq.s32.totalorder %s30, 1
      %p69 = por %p67, %p68
      %p70 = scmp.ne.s32.totalorder %s59, %s60
      %p71 = scmp.eq.s32.totalorder %s30, 0
      %p72 = por %p70, %p71
      %p73 = scmp.ne.s32.totalorder %s59, %s60
      %p74 = scmp.eq.s32.totalorder %s31, 1
      %p75 = por %p73, %p74
      %p77 = scmp.ne.s32.totalorder %s60, %s76
      %p78 = scmp.eq.s32.totalorder %s31, 0
      %p79 = por %p77, %p78
      %s80 = ssub.s32 %s25, %s32
      %p81 = scmp.eq.s32.totalorder %s80, 0
      %s83 = sadd.s32 %s82, 1
      %s84 = scalar_select %p81, %s82, %s83
      %p87 = pneg %p81
      %p88 = scmp.eq.s32.totalorder %s25, 1
      %p89 = por %p87, %p88
      %p90 = scmp.ne.s32.totalorder %s82, %s85
      %p91 = scmp.eq.s32.totalorder %s25, 0
      %p92 = por %p90, %p91
      %p93 = scmp.ne.s32.totalorder %s82, %s85
      %p94 = scmp.eq.s32.totalorder %s30, 1
      %p95 = por %p93, %p94
      %p96 = scmp.ne.s32.totalorder %s85, %s86
      %p97 = scmp.eq.s32.totalorder %s30, 0
      %p98 = por %p96, %p97
      %p99 = scmp.ne.s32.totalorder %s85, %s86
      %p100 = scmp.eq.s32.totalorder %s31, 1
      %p101 = por %p99, %p100
      %p103 = scmp.ne.s32.totalorder %s86, %s102
      %p104 = scmp.eq.s32.totalorder %s31, 0
      %p105 = por %p103, %p104
      %s106 = ssub.s32 %s25, %s32
      %p107 = scmp.eq.s32.totalorder %s106, 0
      %s109 = sadd.s32 %s108, 1
      %s110 = scalar_select %p107, %s108, %s109
      %p113 = pneg %p107
      %p114 = scmp.eq.s32.totalorder %s25, 1
      %p115 = por %p113, %p114
      %p116 = scmp.ne.s32.totalorder %s108, %s111
      %p117 = scmp.eq.s32.totalorder %s25, 0
      %p118 = por %p116, %p117
      %p119 = scmp.ne.s32.totalorder %s108, %s111
      %p120 = scmp.eq.s32.totalorder %s30, 1
      %p121 = por %p119, %p120
      %p122 = scmp.ne.s32.totalorder %s111, %s112
      %p123 = scmp.eq.s32.totalorder %s30, 0
      %p124 = por %p122, %p123
      %p125 = scmp.ne.s32.totalorder %s111, %s112
      %p126 = scmp.eq.s32.totalorder %s31, 1
      %p127 = por %p125, %p126
      %p129 = scmp.ne.s32.totalorder %s112, %s128
      %p130 = scmp.eq.s32.totalorder %s31, 0
      %p131 = por %p129, %p130
      %s132 = ssub.s32 %s25, %s32
      %p133 = scmp.eq.s32.totalorder %s132, 0
      %s135 = sadd.s32 %s134, 1
      %s136 = scalar_select %p133, %s134, %s135
      %p139 = pneg %p133
      %p140 = scmp.eq.s32.totalorder %s25, 1
      %p141 = por %p139, %p140
      %p142 = scmp.ne.s32.totalorder %s134, %s137
      %p143 = scmp.eq.s32.totalorder %s25, 0
      %p144 = por %p142, %p143
      %p145 = scmp.ne.s32.totalorder %s134, %s137
      %p146 = scmp.eq.s32.totalorder %s30, 1
      %p147 = por %p145, %p146
      %p148 = scmp.ne.s32.totalorder %s137, %s138
      %p149 = scmp.eq.s32.totalorder %s30, 0
      %p150 = por %p148, %p149
      %p151 = scmp.ne.s32.totalorder %s137, %s138
      %p152 = scmp.eq.s32.totalorder %s31, 1
      %p153 = por %p151, %p152
      %p155 = scmp.ne.s32.totalorder %s138, %s154
      %p156 = scmp.eq.s32.totalorder %s31, 0
      %p157 = por %p155, %p156
      %s158 = ssub.s32 %s25, %s32
      %p159 = scmp.eq.s32.totalorder %s158, 0
      %s161 = sadd.s32 %s160, 1
      %s162 = scalar_select %p159, %s160, %s161
      %p165 = pneg %p159
      %p166 = scmp.eq.s32.totalorder %s25, 1
      %p167 = por %p165, %p166
      %p168 = scmp.ne.s32.totalorder %s160, %s163
      %p169 = scmp.eq.s32.totalorder %s25, 0
      %p170 = por %p168, %p169
      %p171 = scmp.ne.s32.totalorder %s160, %s163
      %p172 = scmp.eq.s32.totalorder %s30, 1
      %p173 = por %p171, %p172
      %p174 = scmp.ne.s32.totalorder %s163, %s164
      %p175 = scmp.eq.s32.totalorder %s30, 0
      %p176 = por %p174, %p175
      %p177 = scmp.ne.s32.totalorder %s163, %s164
      %p178 = scmp.eq.s32.totalorder %s31, 1
      %p179 = por %p177, %p178
      %p181 = scmp.ne.s32.totalorder %s164, %s180
      %p182 = scmp.eq.s32.totalorder %s31, 0
      %p183 = por %p181, %p182
      %s184 = ssub.s32 %s25, %s32
      %p185 = scmp.eq.s32.totalorder %s184, 0
      %s187 = sadd.s32 %s186, 1
      %s188 = scalar_select %p185, %s186, %s187
      %p191 = pneg %p185
      %p192 = scmp.eq.s32.totalorder %s25, 1
      %p193 = por %p191, %p192
      %p194 = scmp.ne.s32.totalorder %s186, %s189
      %p195 = scmp.eq.s32.totalorder %s25, 0
      %p196 = por %p194, %p195
      %p197 = scmp.ne.s32.totalorder %s186, %s189
      %p198 = scmp.eq.s32.totalorder %s30, 1
      %p199 = por %p197, %p198
      %p200 = scmp.ne.s32.totalorder %s189, %s190
      %p201 = scmp.eq.s32.totalorder %s30, 0
      %p202 = por %p200, %p201
      %p203 = scmp.ne.s32.totalorder %s189, %s190
      %p204 = scmp.eq.s32.totalorder %s31, 1
      %p205 = por %p203, %p204
      %p207 = scmp.ne.s32.totalorder %s190, %s206
      %p208 = scmp.eq.s32.totalorder %s31, 0
      %p209 = por %p207, %p208
      %s210 = ssub.s32 %s25, %s32
      %p211 = scmp.eq.s32.totalorder %s210, 0
      %s213 = sadd.s32 %s212, 1
      %s214 = scalar_select %p211, %s212, %s213
      %p217 = pneg %p211
      %p218 = scmp.eq.s32.totalorder %s25, 1
      %p219 = por %p217, %p218
      %p220 = scmp.ne.s32.totalorder %s212, %s215
      %p221 = scmp.eq.s32.totalorder %s25, 0
      %p222 = por %p220, %p221
      %p223 = scmp.ne.s32.totalorder %s212, %s215
      %p224 = scmp.eq.s32.totalorder %s30, 1
      %p225 = por %p223, %p224
      %p226 = scmp.ne.s32.totalorder %s215, %s216
      %p227 = scmp.eq.s32.totalorder %s30, 0
      %p228 = por %p226, %p227
      %p229 = scmp.ne.s32.totalorder %s215, %s216
      %p230 = scmp.eq.s32.totalorder %s31, 1
      %p231 = por %p229, %p230
      %p233 = scmp.ne.s32.totalorder %s216, %s232
      %p234 = scmp.eq.s32.totalorder %s31, 0
      %p235 = por %p233, %p234
      %s236 = ssub.s32 %s25, %s32
      %p237 = scmp.eq.s32.totalorder %s236, 0
      %s239 = sadd.s32 %s238, 1
      %s240 = scalar_select %p237, %s238, %s239
      %p243 = pneg %p237
      %p244 = scmp.eq.s32.totalorder %s25, 1
      %p245 = por %p243, %p244
      %p246 = scmp.ne.s32.totalorder %s238, %s241
      %p247 = scmp.eq.s32.totalorder %s25, 0
      %p248 = por %p246, %p247
      %p249 = scmp.ne.s32.totalorder %s238, %s241
      %p250 = scmp.eq.s32.totalorder %s30, 1
      %p251 = por %p249, %p250
      %p252 = scmp.ne.s32.totalorder %s241, %s242
      %p253 = scmp.eq.s32.totalorder %s30, 0
      %p254 = por %p252, %p253
      %p255 = scmp.ne.s32.totalorder %s241, %s242
      %p256 = scmp.eq.s32.totalorder %s31, 1
      %p257 = por %p255, %p256
      %p259 = scmp.ne.s32.totalorder %s242, %s258
      %p260 = scmp.eq.s32.totalorder %s31, 0
      %p261 = por %p259, %p260
      %s263 = sadd.s32 %s262, 1
      %p266 = scmp.eq.s32.totalorder %s25, 1
      %p267 = scmp.ne.s32.totalorder %s262, %s264
      %p268 = scmp.eq.s32.totalorder %s25, 0
      %p269 = por %p267, %p268
      %p270 = scmp.ne.s32.totalorder %s262, %s264
      %p271 = scmp.eq.s32.totalorder %s30, 1
      %p272 = por %p270, %p271
      %p273 = scmp.ne.s32.totalorder %s264, %s265
      %p274 = scmp.eq.s32.totalorder %s30, 0
      %p275 = por %p273, %p274
      %p276 = scmp.ne.s32.totalorder %s264, %s265
      %p277 = scmp.eq.s32.totalorder %s31, 1
      %p278 = por %p276, %p277
      %p280 = scmp.ne.s32.totalorder %s265, %s279
      %p281 = scmp.eq.s32.totalorder %s31, 0
      %p282 = por %p280, %p281
      %s284 = sadd.s32 %s283, 1
      %p287 = scmp.eq.s32.totalorder %s25, 1
      %p288 = scmp.ne.s32.totalorder %s283, %s285
      %p289 = scmp.eq.s32.totalorder %s25, 0
      %p290 = por %p288, %p289
      %p291 = scmp.ne.s32.totalorder %s283, %s285
      %p292 = scmp.eq.s32.totalorder %s30, 1
      %p293 = por %p291, %p292
      %p294 = scmp.ne.s32.totalorder %s285, %s286
      %p295 = scmp.eq.s32.totalorder %s30, 0
      %p296 = por %p294, %p295
      %p297 = scmp.ne.s32.totalorder %s285, %s286
      %p298 = scmp.eq.s32.totalorder %s31, 1
      %p299 = por %p297, %p298
      %p301 = scmp.ne.s32.totalorder %s286, %s300
      %p302 = scmp.eq.s32.totalorder %s31, 0
      %p303 = por %p301, %p302
      %s305 = sadd.s32 %s304, 1
      %p308 = scmp.eq.s32.totalorder %s25, 1
      %p309 = scmp.ne.s32.totalorder %s304, %s306
      %p310 = scmp.eq.s32.totalorder %s25, 0
      %p311 = por %p309, %p310
      %p312 = scmp.ne.s32.totalorder %s304, %s306
      %p313 = scmp.eq.s32.totalorder %s30, 1
      %p314 = por %p312, %p313
      %p315 = scmp.ne.s32.totalorder %s306, %s307
      %p316 = scmp.eq.s32.totalorder %s30, 0
      %p317 = por %p315, %p316
      %p318 = scmp.ne.s32.totalorder %s306, %s307
      %p319 = scmp.eq.s32.totalorder %s31, 1
      %p320 = por %p318, %p319
      %p322 = scmp.ne.s32.totalorder %s307, %s321
      %p323 = scmp.eq.s32.totalorder %s31, 0
      %p324 = por %p322, %p323
      %p325 = scmp.le.s32.totalorder 1, %s25
      %p326 = scmp.lt.s32.totalorder %s25, 3
      %p327 = pnand %p325, %p326
      %p328 = pneg %p327
      // Predicated region
      $region9: #{decoder_forward.1} parent=5 // pred_check
        _
      $region10: #{decoder_forward.1} parent=5 // pred_check_branch
        %330 = sbr.rel (%p327) target = $region12
      $region11: #{decoder_forward.1} parent=5 // pred_region
        %s331 = ssub.s32 %s25, 1
        // Predicated region
        $region13: #{decoder_forward.1} parent=11 // pred_check
          %p332 = pneg %p46
        $region14: #{decoder_forward.1} parent=11 // pred_check_branch
          %334 = sbr.rel (%p332) target = $region16
        $region15: #{decoder_forward.1} parent=11 // pred_region
          %s336 = ssub.s32 128, 128
          %337 = vsyncadd [#allocation4], %s336
          %s339 = sshll.u32 [#allocation3], 4
          %s340 = int_to_ptr.vmem [resolvable:$true] %s339
          %342 = dma.hbm_to_vmem [thread:$0]  %s0, 128, %s340, [#allocation4]
        $region16: #{decoder_forward.1} parent=11 // pred_fallthru
          _
        // Predicated region
        $region17: #{decoder_forward.1} parent=11 // pred_check
          %p343 = pneg %p275
        $region18: #{decoder_forward.1} parent=11 // pred_check_branch
          %345 = sbr.rel (%p343) target = $region20
        $region19: #{decoder_forward.1} parent=11 // pred_region
          _
        $region20: #{decoder_forward.1} parent=11 // pred_fallthru
          _
        // Predicated region
        $region21: #{decoder_forward.1} parent=11 // pred_check
          %p346 = pneg %p296
        $region22: #{decoder_forward.1} parent=11 // pred_check_branch
          %348 = sbr.rel (%p346) target = $region24
        $region23: #{decoder_forward.1} parent=11 // pred_region
          _
        $region24: #{decoder_forward.1} parent=11 // pred_fallthru
          _
      $region12: #{decoder_forward.1} parent=5 // pred_fallthru
        _
      %p349 = scmp.lt.s32.totalorder %s25, 2
      // Predicated region
      $region25: #{decoder_forward.1} parent=5 // pred_check
        %p350 = pneg %p349
      $region26: #{decoder_forward.1} parent=5 // pred_check_branch
        %352 = sbr.rel (%p350) target = $region28
      $region27: #{decoder_forward.1} parent=5 // pred_region
        // Predicated region
        $region29: #{decoder_forward.1} parent=27 // pred_check
          %p353 = pneg %p66
        $region30: #{decoder_forward.1} parent=27 // pred_check_branch
          %355 = sbr.rel (%p353) target = $region32
        $region31: #{decoder_forward.1} parent=27 // pred_region
          %s356 = sand.u32 %s25, 1
          %s357 = scalar_lea.sflag [#allocation7], %s356
          %s358 = sand.u32 %s56, 1
          %s359 = smul.addr %s358, 16
          %s360 = scalar_lea.vmem [#allocation6], %s359
          %s362 = ssub.s32 256, 256
          %363 = vsyncadd %s357, %s362
          %s364 = smul.addr %s25, 4
          %s365 = smul.addr %s364, 64
          %s366 = scalar_lea.hbm %s1, %s365
          %s367 = sshll.u32 %s360, 4
          %s368 = int_to_ptr.vmem [resolvable:$true] %s367
          %373 = dma.hbm_to_vmem [thread:$0]  %s366, 256, %s368, %s357, 64, 64, 4
        $region32: #{decoder_forward.1} parent=27 // pred_fallthru
          _
        // Predicated region
        $region33: #{decoder_forward.1} parent=27 // pred_check
          %p374 = pneg %p92
        $region34: #{decoder_forward.1} parent=27 // pred_check_branch
          %376 = sbr.rel (%p374) target = $region36
        $region35: #{decoder_forward.1} parent=27 // pred_region
          %p377 = scmp.lt.s32.totalorder %s25, 1
          %s378 = scalar_select %p377, %s25, 1
          %s379 = scalar_lea.vmem %s2, %s378
        $region36: #{decoder_forward.1} parent=27 // pred_fallthru
          _
        // Predicated region
        $region37: #{decoder_forward.1} parent=27 // pred_check
          %p380 = pneg %p118
        $region38: #{decoder_forward.1} parent=27 // pred_check_branch
          %382 = sbr.rel (%p380) target = $region40
        $region39: #{decoder_forward.1} parent=27 // pred_region
          %s383 = sand.u32 %s25, 1
          %s384 = scalar_lea.sflag [#allocation7], %s383
          %s385 = sand.u32 %s108, 1
          %s386 = smul.addr %s385, 16
          %s387 = scalar_lea.vmem [#allocation8], %s386
          %s389 = ssub.s32 256, 256
          %390 = vsyncadd %s384, %s389
          %s391 = smul.addr %s25, 4
          %s392 = smul.addr %s391, 64
          %s393 = scalar_lea.hbm %s3, %s392
          %s394 = sshll.u32 %s387, 4
          %s395 = int_to_ptr.vmem [resolvable:$true] %s394
          %400 = dma.hbm_to_vmem [thread:$0]  %s393, 256, %s395, %s384, 64, 64, 4
        $region40: #{decoder_forward.1} parent=27 // pred_fallthru
          _
        // Predicated region
        $region41: #{decoder_forward.1} parent=27 // pred_check
          %p401 = pneg %p144
        $region42: #{decoder_forward.1} parent=27 // pred_check_branch
          %403 = sbr.rel (%p401) target = $region44
        $region43: #{decoder_forward.1} parent=27 // pred_region
          %p404 = scmp.lt.s32.totalorder %s25, 1
          %s405 = scalar_select %p404, %s25, 1
          %s406 = scalar_lea.vmem %s4, %s405
        $region44: #{decoder_forward.1} parent=27 // pred_fallthru
          _
        // Predicated region
        $region45: #{decoder_forward.1} parent=27 // pred_check
          %p407 = pneg %p170
        $region46: #{decoder_forward.1} parent=27 // pred_check_branch
          %409 = sbr.rel (%p407) target = $region48
        $region47: #{decoder_forward.1} parent=27 // pred_region
          %p410 = scmp.lt.s32.totalorder %s25, 1
          %s411 = scalar_select %p410, %s25, 1
          %s412 = scalar_lea.vmem %s5, %s411
        $region48: #{decoder_forward.1} parent=27 // pred_fallthru
          _
        // Predicated region
        $region49: #{decoder_forward.1} parent=27 // pred_check
          %p413 = pneg %p196
        $region50: #{decoder_forward.1} parent=27 // pred_check_branch
          %415 = sbr.rel (%p413) target = $region52
        $region51: #{decoder_forward.1} parent=27 // pred_region
          %p416 = scmp.lt.s32.totalorder %s25, 1
          %s417 = scalar_select %p416, %s25, 1
          %s418 = scalar_lea.vmem %s6, %s417
        $region52: #{decoder_forward.1} parent=27 // pred_fallthru
          _
        // Predicated region
        $region53: #{decoder_forward.1} parent=27 // pred_check
          %p419 = pneg %p222
        $region54: #{decoder_forward.1} parent=27 // pred_check_branch
          %421 = sbr.rel (%p419) target = $region56
        $region55: #{decoder_forward.1} parent=27 // pred_region
          %s422 = sand.u32 %s212, 1
          %s423 = scalar_lea.sflag [#allocation10], %s422
          %s424 = sand.u32 %s212, 1
          %s425 = smul.addr %s424, 16
          %s426 = scalar_lea.vmem [#allocation9], %s425
          %s428 = ssub.s32 256, 256
          %429 = vsyncadd %s423, %s428
          %s430 = smul.addr %s25, 4
          %s431 = smul.addr %s430, 64
          %s432 = scalar_lea.hbm %s7, %s431
          %s433 = sshll.u32 %s426, 4
          %s434 = int_to_ptr.vmem [resolvable:$true] %s433
          %439 = dma.hbm_to_vmem [thread:$0]  %s432, 256, %s434, %s423, 64, 64, 4
        $region56: #{decoder_forward.1} parent=27 // pred_fallthru
          _
        // Predicated region
        $region57: #{decoder_forward.1} parent=27 // pred_check
          %p440 = pneg %p248
        $region58: #{decoder_forward.1} parent=27 // pred_check_branch
          %442 = sbr.rel (%p440) target = $region60
        $region59: #{decoder_forward.1} parent=27 // pred_region
          %p443 = scmp.lt.s32.totalorder %s25, 1
          %s444 = scalar_select %p443, %s25, 1
          %s445 = scalar_lea.vmem %s8, %s444
        $region60: #{decoder_forward.1} parent=27 // pred_fallthru
          _
      $region28: #{decoder_forward.1} parent=5 // pred_fallthru
        _
      %p446 = scmp.le.s32.totalorder 1, %s25
      %p447 = scmp.lt.s32.totalorder %s25, 3
      %p448 = pnand %p446, %p447
      %p449 = pneg %p448
      // Predicated region
      $region61: #{decoder_forward.1} parent=5 // pred_check
        _
      $region62: #{decoder_forward.1} parent=5 // pred_check_branch
        %451 = sbr.rel (%p448) target = $region64
      $region63: #{decoder_forward.1} parent=5 // pred_region
        %s452 = ssub.s32 %s25, 1
        // Predicated region
        $region65: #{decoder_forward.1} parent=63 // pred_check
          %p453 = pneg %p46
        $region66: #{decoder_forward.1} parent=63 // pred_check_branch
          %455 = sbr.rel (%p453) target = $region68
        $region67: #{decoder_forward.1} parent=63 // pred_region
          %456 = dma.done [#allocation4], 128
        $region68: #{decoder_forward.1} parent=63 // pred_fallthru
          _
        %s457 = sand.u32 %s30, 1
        %s458 = scalar_lea.sflag [#allocation7], %s457
        %s459 = sand.u32 %s59, 1
        %s460 = smul.addr %s459, 16
        %s461 = scalar_lea.vmem [#allocation6], %s460
        // Predicated region
        $region69: #{decoder_forward.1} parent=63 // pred_check
          %p462 = pneg %p72
        $region70: #{decoder_forward.1} parent=63 // pred_check_branch
          %464 = sbr.rel (%p462) target = $region72
        $region71: #{decoder_forward.1} parent=63 // pred_region
          %465 = dma.done %s458, 256
        $region72: #{decoder_forward.1} parent=63 // pred_fallthru
          _
        %s466 = sand.u32 %s30, 1
        %s467 = scalar_lea.sflag [#allocation7], %s466
        %s468 = sand.u32 %s111, 1
        %s469 = smul.addr %s468, 16
        %s470 = scalar_lea.vmem [#allocation8], %s469
        // Predicated region
        $region73: #{decoder_forward.1} parent=63 // pred_check
          %p471 = pneg %p124
        $region74: #{decoder_forward.1} parent=63 // pred_check_branch
          %473 = sbr.rel (%p471) target = $region76
        $region75: #{decoder_forward.1} parent=63 // pred_region
          %474 = dma.done %s467, 256
        $region76: #{decoder_forward.1} parent=63 // pred_fallthru
          _
        %s475 = sand.u32 %s215, 1
        %s476 = scalar_lea.sflag [#allocation10], %s475
        %s477 = sand.u32 %s215, 1
        %s478 = smul.addr %s477, 16
        %s479 = scalar_lea.vmem [#allocation9], %s478
        // Predicated region
        $region77: #{decoder_forward.1} parent=63 // pred_check
          %p480 = pneg %p228
        $region78: #{decoder_forward.1} parent=63 // pred_check_branch
          %482 = sbr.rel (%p480) target = $region80
        $region79: #{decoder_forward.1} parent=63 // pred_region
          %483 = dma.done %s476, 256
        $region80: #{decoder_forward.1} parent=63 // pred_fallthru
          _
        %p484 = pneg %p46
        %p485 = pneg %p43
        %s486 = sand.u32 %s30, 1
        %s487 = scalar_lea.sflag [#allocation7], %s486
        %s488 = sand.u32 %s59, 1
        %s489 = smul.addr %s488, 16
        %s490 = scalar_lea.vmem [#allocation6], %s489
        %p491 = pneg %p72
        %p492 = pneg %p69
        %p493 = scmp.lt.s32.totalorder %s30, 1
        %s494 = scalar_select %p493, %s30, 1
        %s495 = scalar_lea.vmem %s2, %s494
        %p496 = pneg %p98
        %p497 = pneg %p95
        %s498 = sand.u32 %s30, 1
        %s499 = scalar_lea.sflag [#allocation7], %s498
        %s500 = sand.u32 %s111, 1
        %s501 = smul.addr %s500, 16
        %s502 = scalar_lea.vmem [#allocation8], %s501
        %p503 = pneg %p124
        %p504 = pneg %p121
        %p505 = scmp.lt.s32.totalorder %s30, 1
        %s506 = scalar_select %p505, %s30, 1
        %s507 = scalar_lea.vmem %s4, %s506
        %p508 = pneg %p150
        %p509 = pneg %p147
        %p510 = scmp.lt.s32.totalorder %s30, 1
        %s511 = scalar_select %p510, %s30, 1
        %s512 = scalar_lea.vmem %s5, %s511
        %p513 = pneg %p176
        %p514 = pneg %p173
        %p515 = scmp.lt.s32.totalorder %s30, 1
        %s516 = scalar_select %p515, %s30, 1
        %s517 = scalar_lea.vmem %s6, %s516
        %p518 = pneg %p202
        %p519 = pneg %p199
        %s520 = sand.u32 %s215, 1
        %s521 = scalar_lea.sflag [#allocation10], %s520
        %s522 = sand.u32 %s215, 1
        %s523 = smul.addr %s522, 16
        %s524 = scalar_lea.vmem [#allocation9], %s523
        %p525 = pneg %p228
        %p526 = pneg %p225
        %p527 = scmp.lt.s32.totalorder %s30, 1
        %s528 = scalar_select %p527, %s30, 1
        %s529 = scalar_lea.vmem %s8, %s528
        %p530 = pneg %p254
        %p531 = pneg %p251
        %p532 = pneg %p275
        %p533 = pneg %p272
        %p534 = pneg %p296
        %p535 = pneg %p293
        %p536 = pneg %p317
        %p537 = pneg %p314
        %p538 = scmp.lt.s32.totalorder %s30, 1
        %s539 = scalar_select %p538, %s30, 1
        %s540 = scalar_lea.vmem %s2, %s539
        %p541 = scmp.lt.s32.totalorder %s30, 1
        %s542 = scalar_select %p541, %s30, 1
        %s543 = scalar_lea.vmem %s4, %s542
        %p544 = scmp.lt.s32.totalorder %s30, 1
        %s545 = scalar_select %p544, %s30, 1
        %s546 = scalar_lea.vmem %s5, %s545
        %p547 = scmp.lt.s32.totalorder %s30, 1
        %s548 = scalar_select %p547, %s30, 1
        %s549 = scalar_lea.vmem %s6, %s548
        %p550 = scmp.lt.s32.totalorder %s30, 1
        %s551 = scalar_select %p550, %s30, 1
        %s552 = scalar_lea.vmem %s8, %s551
        %v554 = vld [vmem:[#allocation3] sm:$0xff]
        %p555 = scmp.eq.s32.totalorder %s30, 0
        // Predicated region
        $region81: #{decoder_forward.1} parent=63 // pred_check
          %p556 = pneg %p555
        $region82: #{decoder_forward.1} parent=63 // pred_check_branch
          %558 = sbr.rel (%p556) target = $region84
        $region83: #{decoder_forward.1} parent=63 // pred_region
          %vm559 = vcmask 261120
          %560 = vst.msk [vmem:[#allocation2] sm:$0xff] %vm559, %v554
        $region84: #{decoder_forward.1} parent=63 // pred_fallthru
          _
        %v561 = vld [vmem:[#allocation2] sm:$0xff]
        %v562 = vld [vmem:[%s461] sm:$0xf]
        %v563 = vld [vmem:[%s461 + $0x4] sm:$0xf]
        %v564 = vld [vmem:[%s461 + $0x8] sm:$0xf]
        %v565 = vld [vmem:[%s461 + $0xc] sm:$0xf]
        %v566 = vpack.c.bf16 %v561, %v561
        %v567 = vld [vmem:[%s540] sm:$0x1]
        %v569 = vlaneseq
        %v570 = vshrl.u32 %v569, 7
        %v571 = vsub.s32 0, %v570
        %v572 = vrot.slane %v567, %v571
        %v578 = vunpack.c.l.b16 %v562
        %v579 = vunpack.c.l.b16 %v563
        %v580 = vunpack.c.l.b16 %v564
        %v581 = vunpack.c.l.b16 %v565
        %v582 = vpack.c.b16 %v579, %v578
        %v583 = vpack.c.b16 %v581, %v580
        %vm586 = vcmask 261120
        %v588 = vsel %vm586, %v566, 0
        %590 = vmatprep.subr.bf16.mxu0 0
        %591 = vmatpush1.bf16.msra.mxu0 %v582
        %592 = vmatprep.subr.bf16.mxu0 0
        %593 = vmatpush1.bf16.msra.mxu0 %v583
        %594 = vmatprep.subr.bf16.mxu0 0
        %595 = vmatpush1.bf16.msra.mxu0 0
        %596 = vmatprep.subr.bf16.mxu0 0
        %597 = vmatpush1.bf16.msra.mxu0 0
        %598 = vmatprep.subr.bf16.mxu0 0
        %599 = vmatpush1.bf16.msra.mxu0 0
        %600 = vmatprep.subr.bf16.mxu0 0
        %601 = vmatpush1.bf16.msra.mxu0 0
        %602 = vmatprep.subr.bf16.mxu0 0
        %603 = vmatpush1.bf16.msra.mxu0 0
        %604 = vmatprep.subr.bf16.mxu0 0
        %605 = vmatpush1.bf16.msra.mxu0 0
        %606 = vmatprep.subr.bf16.mxu0 0
        %607 = vmatpush1.bf16.msra.mxu0 0
        %608 = vmatprep.subr.bf16.mxu0 0
        %609 = vmatpush1.bf16.msra.mxu0 0
        %610 = vmatprep.subr.bf16.mxu0 0
        %611 = vmatpush1.bf16.msra.mxu0 0
        %612 = vmatprep.subr.bf16.mxu0 0
        %613 = vmatpush1.bf16.msra.mxu0 0
        %614 = vmatprep.subr.bf16.mxu0 0
        %615 = vmatpush1.bf16.msra.mxu0 0
        %616 = vmatprep.subr.bf16.mxu0 0
        %617 = vmatpush1.bf16.msra.mxu0 0
        %618 = vmatprep.subr.bf16.mxu0 0
        %619 = vmatpush1.bf16.msra.mxu0 0
        %620 = vmatprep.subr.bf16.mxu0 0
        %621 = vmatpush1.bf16.msra.mxu0 0
        %622 = vmatprep.mubr.bf16.mxu0 0
        %623 = vmatmul.mubr.bf16.gmra.mrb[0].mxu0 %v588
        %v624 = vpop.f32.mrb[0].mxu0
        %v625 = vadd.f32 %v572, %v624
        %v626 = vpop.f32.mrb[0].mxu0
        %v627 = vpop.f32.mrb[0].mxu0
        %v628 = vpop.f32.mrb[0].mxu0
        %629 = vdwg.mxu0
        %v630 = vlaneseq
        %v631 = vshrl.u32 %v630, 7
        %v632 = vsub.s32 0, %v631
        %v633 = vrot.slane %v625, %v632
        %635 = vbcast.lane.b32.xlu0 %v633, 256
        %v636 = vpop.permute.xlu0 %635
        %v637 = vlaneseq
        %v638 = vshrl.u32 %v637, 7
        %v639 = vsub.s32 1, %v638
        %v640 = vrot.slane %v625, %v639
        %642 = vbcast.lane.b32.xlu0 %v640, 256
        %v643 = vpop.permute.xlu0 %642
        %v644 = vlaneseq
        %v645 = vshrl.u32 %v644, 7
        %v646 = vsub.s32 2, %v645
        %v647 = vrot.slane %v625, %v646
        %649 = vbcast.lane.b32.xlu0 %v647, 256
        %v650 = vpop.permute.xlu0 %649
        %v651 = vlaneseq
        %v652 = vshrl.u32 %v651, 7
        %v653 = vsub.s32 3, %v652
        %v654 = vrot.slane %v625, %v653
        %656 = vbcast.lane.b32.xlu0 %v654, 256
        %v657 = vpop.permute.xlu0 %656
        %v658 = vlaneseq
        %v659 = vshrl.u32 %v658, 7
        %v660 = vsub.s32 4, %v659
        %v661 = vrot.slane %v625, %v660
        %663 = vbcast.lane.b32.xlu0 %v661, 256
        %v664 = vpop.permute.xlu0 %663
        %v665 = vlaneseq
        %v666 = vshrl.u32 %v665, 7
        %v667 = vsub.s32 5, %v666
        %v668 = vrot.slane %v625, %v667
        %670 = vbcast.lane.b32.xlu0 %v668, 256
        %v671 = vpop.permute.xlu0 %670
        %v672 = vlaneseq
        %v673 = vshrl.u32 %v672, 7
        %v674 = vsub.s32 6, %v673
        %v675 = vrot.slane %v625, %v674
        %677 = vbcast.lane.b32.xlu0 %v675, 256
        %v678 = vpop.permute.xlu0 %677
        %v679 = vlaneseq
        %v680 = vshrl.u32 %v679, 7
        %v681 = vsub.s32 7, %v680
        %v682 = vrot.slane %v625, %v681
        %684 = vbcast.lane.b32.xlu0 %v682, 256
        %v685 = vpop.permute.xlu0 %684
        %v687 = vcombine.high %v625, %v625
        %v689 = vunpack.c.l.s4 1966171168
        %v690 = vunpack.c.0.s8 %v689
        %v691 = vlaneseq
        %v692 = vshrl.u32 %v691, 7
        %v693 = vsub.s32 %v690, %v692
        %v694 = vrot.slane %v625, %v693
        %v696 = vunpack.c.l.s4 1966171168
        %v697 = vunpack.c.0.s8 %v696
        %v698 = vlaneseq
        %v699 = vshrl.u32 %v698, 7
        %v700 = vsub.s32 %v697, %v699
        %v701 = vrot.slane %v687, %v700
        %v702 = vcombine.high %v694, %v694
        %v703 = vcombine.high %v701, %v701
        %v705 = vunpack.c.l.s4 1966171168
        %v706 = vunpack.c.0.s8 %v705
        %v707 = vlaneseq
        %v708 = vshrl.u32 %v707, 7
        %v709 = vsub.s32 %v706, %v708
        %v710 = vrot.slane %v694, %v709
        %v712 = vunpack.c.l.s4 1966171168
        %v713 = vunpack.c.0.s8 %v712
        %v714 = vlaneseq
        %v715 = vshrl.u32 %v714, 7
        %v716 = vsub.s32 %v713, %v715
        %v717 = vrot.slane %v701, %v716
        %v719 = vunpack.c.l.s4 1966171168
        %v720 = vunpack.c.0.s8 %v719
        %v721 = vlaneseq
        %v722 = vshrl.u32 %v721, 7
        %v723 = vsub.s32 %v720, %v722
        %v724 = vrot.slane %v702, %v723
        %v726 = vunpack.c.l.s4 1966171168
        %v727 = vunpack.c.0.s8 %v726
        %v728 = vlaneseq
        %v729 = vshrl.u32 %v728, 7
        %v730 = vsub.s32 %v727, %v729
        %v731 = vrot.slane %v703, %v730
        %v732 = vcombine.high %v710, %v710
        %v733 = vcombine.high %v717, %v717
        %v734 = vcombine.high %v724, %v724
        %v735 = vcombine.high %v731, %v731
        %v736 = vlaneseq
        %v737 = vshrl.u32 %v736, 7
        %v738 = vsub.s32 0, %v737
        %v739 = vrot.slane %v710, %v738
        %v740 = vlaneseq
        %v741 = vshrl.u32 %v740, 7
        %v742 = vsub.s32 0, %v741
        %v743 = vrot.slane %v724, %v742
        %v744 = vlaneseq
        %v745 = vshrl.u32 %v744, 7
        %v746 = vsub.s32 0, %v745
        %v747 = vrot.slane %v732, %v746
        %v748 = vlaneseq
        %v749 = vshrl.u32 %v748, 7
        %v750 = vsub.s32 0, %v749
        %v751 = vrot.slane %v734, %v750
        %v752 = vlaneseq
        %v753 = vshrl.u32 %v752, 7
        %v754 = vsub.s32 0, %v753
        %v755 = vrot.slane %v717, %v754
        %v756 = vlaneseq
        %v757 = vshrl.u32 %v756, 7
        %v758 = vsub.s32 0, %v757
        %v759 = vrot.slane %v731, %v758
        %v760 = vlaneseq
        %v761 = vshrl.u32 %v760, 7
        %v762 = vsub.s32 0, %v761
        %v763 = vrot.slane %v733, %v762
        %v764 = vlaneseq
        %v765 = vshrl.u32 %v764, 7
        %v766 = vsub.s32 0, %v765
        %v767 = vrot.slane %v735, %v766
        %v776 = vmul.f32 %v636, %v739
        %v777 = vmul.f32 %v643, %v743
        %v778 = vmul.f32 %v650, %v747
        %v779 = vmul.f32 %v657, %v751
        %v780 = vmul.f32 %v664, %v755
        %v781 = vmul.f32 %v671, %v759
        %v782 = vmul.f32 %v678, %v763
        %v783 = vmul.f32 %v685, %v767
        %v784 = vadd.f32 %v776, 0.0
        %v785 = vadd.f32 %v777, 0.0
        %v786 = vadd.f32 %v778, 0.0
        %v787 = vadd.f32 %v779, 0.0
        %v788 = vadd.f32 %v780, 0.0
        %v789 = vadd.f32 %v781, 0.0
        %v790 = vadd.f32 %v782, 0.0
        %v791 = vadd.f32 %v783, 0.0
        %s793 = sor.u32 256, 8
        %794 = vbcast.lane.b32.xlu0 %v633, %s793
        %v795 = vpop.permute.xlu0 %794
        %s797 = sor.u32 256, 8
        %798 = vbcast.lane.b32.xlu0 %v640, %s797
        %v799 = vpop.permute.xlu0 %798
        %s801 = sor.u32 256, 8
        %802 = vbcast.lane.b32.xlu0 %v647, %s801
        %v803 = vpop.permute.xlu0 %802
        %s805 = sor.u32 256, 8
        %806 = vbcast.lane.b32.xlu0 %v654, %s805
        %v807 = vpop.permute.xlu0 %806
        %s809 = sor.u32 256, 8
        %810 = vbcast.lane.b32.xlu0 %v661, %s809
        %v811 = vpop.permute.xlu0 %810
        %s813 = sor.u32 256, 8
        %814 = vbcast.lane.b32.xlu0 %v668, %s813
        %v815 = vpop.permute.xlu0 %814
        %s817 = sor.u32 256, 8
        %818 = vbcast.lane.b32.xlu0 %v675, %s817
        %v819 = vpop.permute.xlu0 %818
        %s821 = sor.u32 256, 8
        %822 = vbcast.lane.b32.xlu0 %v682, %s821
        %v823 = vpop.permute.xlu0 %822
        %v824 = vmul.f32 %v795, %v739
        %v825 = vmul.f32 %v799, %v743
        %v826 = vmul.f32 %v803, %v747
        %v827 = vmul.f32 %v807, %v751
        %v828 = vmul.f32 %v811, %v755
        %v829 = vmul.f32 %v815, %v759
        %v830 = vmul.f32 %v819, %v763
        %v831 = vmul.f32 %v823, %v767
        %840 = vrot.lane.b32.xlu0 %v824, 120
        %v841 = vpop.permute.xlu0 %840
        %842 = vrot.lane.b32.xlu0 %v825, 120
        %v843 = vpop.permute.xlu0 %842
        %844 = vrot.lane.b32.xlu0 %v826, 120
        %v845 = vpop.permute.xlu0 %844
        %846 = vrot.lane.b32.xlu0 %v827, 120
        %v847 = vpop.permute.xlu0 %846
        %848 = vrot.lane.b32.xlu0 %v828, 120
        %v849 = vpop.permute.xlu0 %848
        %850 = vrot.lane.b32.xlu0 %v829, 120
        %v851 = vpop.permute.xlu0 %850
        %852 = vrot.lane.b32.xlu0 %v830, 120
        %v853 = vpop.permute.xlu0 %852
        %854 = vrot.lane.b32.xlu0 %v831, 120
        %v855 = vpop.permute.xlu0 %854
        %v864 = vadd.f32 %v784, %v841
        %v865 = vadd.f32 %v785, %v843
        %v866 = vadd.f32 %v786, %v845
        %v867 = vadd.f32 %v787, %v847
        %v868 = vadd.f32 %v788, %v849
        %v869 = vadd.f32 %v789, %v851
        %v870 = vadd.f32 %v790, %v853
        %v871 = vadd.f32 %v791, %v855
        %s873 = sor.u32 256, 16
        %874 = vbcast.lane.b32.xlu0 %v633, %s873
        %v875 = vpop.permute.xlu0 %874
        %s877 = sor.u32 256, 16
        %878 = vbcast.lane.b32.xlu0 %v640, %s877
        %v879 = vpop.permute.xlu0 %878
        %s881 = sor.u32 256, 16
        %882 = vbcast.lane.b32.xlu0 %v647, %s881
        %v883 = vpop.permute.xlu0 %882
        %s885 = sor.u32 256, 16
        %886 = vbcast.lane.b32.xlu0 %v654, %s885
        %v887 = vpop.permute.xlu0 %886
        %s889 = sor.u32 256, 16
        %890 = vbcast.lane.b32.xlu0 %v661, %s889
        %v891 = vpop.permute.xlu0 %890
        %s893 = sor.u32 256, 16
        %894 = vbcast.lane.b32.xlu0 %v668, %s893
        %v895 = vpop.permute.xlu0 %894
        %s897 = sor.u32 256, 16
        %898 = vbcast.lane.b32.xlu0 %v675, %s897
        %v899 = vpop.permute.xlu0 %898
        %s901 = sor.u32 256, 16
        %902 = vbcast.lane.b32.xlu0 %v682, %s901
        %v903 = vpop.permute.xlu0 %902
        %v904 = vmul.f32 %v875, %v739
        %v905 = vmul.f32 %v879, %v743
        %v906 = vmul.f32 %v883, %v747
        %v907 = vmul.f32 %v887, %v751
        %v908 = vmul.f32 %v891, %v755
        %v909 = vmul.f32 %v895, %v759
        %v910 = vmul.f32 %v899, %v763
        %v911 = vmul.f32 %v903, %v767
        %920 = vrot.lane.b32.xlu0 %v904, 112
        %v921 = vpop.permute.xlu0 %920
        %922 = vrot.lane.b32.xlu0 %v905, 112
        %v923 = vpop.permute.xlu0 %922
        %924 = vrot.lane.b32.xlu0 %v906, 112
        %v925 = vpop.permute.xlu0 %924
        %926 = vrot.lane.b32.xlu0 %v907, 112
        %v927 = vpop.permute.xlu0 %926
        %928 = vrot.lane.b32.xlu0 %v908, 112
        %v929 = vpop.permute.xlu0 %928
        %930 = vrot.lane.b32.xlu0 %v909, 112
        %v931 = vpop.permute.xlu0 %930
        %932 = vrot.lane.b32.xlu0 %v910, 112
        %v933 = vpop.permute.xlu0 %932
        %934 = vrot.lane.b32.xlu0 %v911, 112
        %v935 = vpop.permute.xlu0 %934
        %v944 = vadd.f32 %v864, %v921
        %v945 = vadd.f32 %v865, %v923
        %v946 = vadd.f32 %v866, %v925
        %v947 = vadd.f32 %v867, %v927
        %v948 = vadd.f32 %v868, %v929
        %v949 = vadd.f32 %v869, %v931
        %v950 = vadd.f32 %v870, %v933
        %v951 = vadd.f32 %v871, %v935
        %s953 = sor.u32 256, 24
        %954 = vbcast.lane.b32.xlu0 %v633, %s953
        %v955 = vpop.permute.xlu0 %954
        %s957 = sor.u32 256, 24
        %958 = vbcast.lane.b32.xlu0 %v640, %s957
        %v959 = vpop.permute.xlu0 %958
        %s961 = sor.u32 256, 24
        %962 = vbcast.lane.b32.xlu0 %v647, %s961
        %v963 = vpop.permute.xlu0 %962
        %s965 = sor.u32 256, 24
        %966 = vbcast.lane.b32.xlu0 %v654, %s965
        %v967 = vpop.permute.xlu0 %966
        %s969 = sor.u32 256, 24
        %970 = vbcast.lane.b32.xlu0 %v661, %s969
        %v971 = vpop.permute.xlu0 %970
        %s973 = sor.u32 256, 24
        %974 = vbcast.lane.b32.xlu0 %v668, %s973
        %v975 = vpop.permute.xlu0 %974
        %s977 = sor.u32 256, 24
        %978 = vbcast.lane.b32.xlu0 %v675, %s977
        %v979 = vpop.permute.xlu0 %978
        %s981 = sor.u32 256, 24
        %982 = vbcast.lane.b32.xlu0 %v682, %s981
        %v983 = vpop.permute.xlu0 %982
        %v984 = vmul.f32 %v955, %v739
        %v985 = vmul.f32 %v959, %v743
        %v986 = vmul.f32 %v963, %v747
        %v987 = vmul.f32 %v967, %v751
        %v988 = vmul.f32 %v971, %v755
        %v989 = vmul.f32 %v975, %v759
        %v990 = vmul.f32 %v979, %v763
        %v991 = vmul.f32 %v983, %v767
        %1000 = vrot.lane.b32.xlu0 %v984, 104
        %v1001 = vpop.permute.xlu0 %1000
        %1002 = vrot.lane.b32.xlu0 %v985, 104
        %v1003 = vpop.permute.xlu0 %1002
        %1004 = vrot.lane.b32.xlu0 %v986, 104
        %v1005 = vpop.permute.xlu0 %1004
        %1006 = vrot.lane.b32.xlu0 %v987, 104
        %v1007 = vpop.permute.xlu0 %1006
        %1008 = vrot.lane.b32.xlu0 %v988, 104
        %v1009 = vpop.permute.xlu0 %1008
        %1010 = vrot.lane.b32.xlu0 %v989, 104
        %v1011 = vpop.permute.xlu0 %1010
        %1012 = vrot.lane.b32.xlu0 %v990, 104
        %v1013 = vpop.permute.xlu0 %1012
        %1014 = vrot.lane.b32.xlu0 %v991, 104
        %v1015 = vpop.permute.xlu0 %1014
        %v1024 = vadd.f32 %v944, %v1001
        %v1025 = vadd.f32 %v945, %v1003
        %v1026 = vadd.f32 %v946, %v1005
        %v1027 = vadd.f32 %v947, %v1007
        %v1028 = vadd.f32 %v948, %v1009
        %v1029 = vadd.f32 %v949, %v1011
        %v1030 = vadd.f32 %v950, %v1013
        %v1031 = vadd.f32 %v951, %v1015
        %v1032 = vmul.f32 %v1024, 0.5
        %v1033 = vmul.f32 %v1025, 0.5
        %v1034 = vmul.f32 %v1026, 0.5
        %v1035 = vmul.f32 %v1027, 0.5
        %v1036 = vmul.f32 %v1028, 0.5
        %v1037 = vmul.f32 %v1029, 0.5
        %v1038 = vmul.f32 %v1030, 0.5
        %v1039 = vmul.f32 %v1031, 0.5
        %vm1040 = vcmask 326912
        %v1041 = vsel %vm1040, %v1032, -inf
        %1042 = vmax.xlane.f32.xlu0 %v1041
        %v1043 = vpop.xlane.xlu0 %1042
        %v1044 = vsel %vm1040, %v1033, -inf
        %1045 = vmax.xlane.f32.xlu0 %v1044
        %v1046 = vpop.xlane.xlu0 %1045
        %v1047 = vsel %vm1040, %v1034, -inf
        %1048 = vmax.xlane.f32.xlu0 %v1047
        %v1049 = vpop.xlane.xlu0 %1048
        %v1050 = vsel %vm1040, %v1035, -inf
        %1051 = vmax.xlane.f32.xlu0 %v1050
        %v1052 = vpop.xlane.xlu0 %1051
        %v1053 = vsel %vm1040, %v1036, -inf
        %1054 = vmax.xlane.f32.xlu0 %v1053
        %v1055 = vpop.xlane.xlu0 %1054
        %v1056 = vsel %vm1040, %v1037, -inf
        %1057 = vmax.xlane.f32.xlu0 %v1056
        %v1058 = vpop.xlane.xlu0 %1057
        %v1059 = vsel %vm1040, %v1038, -inf
        %1060 = vmax.xlane.f32.xlu0 %v1059
        %v1061 = vpop.xlane.xlu0 %1060
        %v1062 = vsel %vm1040, %v1039, -inf
        %1063 = vmax.xlane.f32.xlu0 %v1062
        %v1064 = vpop.xlane.xlu0 %1063
        %v1065 = vsub.f32 %v1032, %v1043
        %v1066 = vsub.f32 %v1033, %v1046
        %v1067 = vsub.f32 %v1034, %v1049
        %v1068 = vsub.f32 %v1035, %v1052
        %v1069 = vsub.f32 %v1036, %v1055
        %v1070 = vsub.f32 %v1037, %v1058
        %v1071 = vsub.f32 %v1038, %v1061
        %v1072 = vsub.f32 %v1039, %v1064
        %v1073 = vmul.f32 %v1065, 1.442695
        %v1074 = vpow.pop %v1073
        %v1075 = vmul.f32 %v1066, 1.442695
        %v1076 = vpow.pop %v1075
        %v1077 = vmul.f32 %v1067, 1.442695
        %v1078 = vpow.pop %v1077
        %v1079 = vmul.f32 %v1068, 1.442695
        %v1080 = vpow.pop %v1079
        %v1081 = vmul.f32 %v1069, 1.442695
        %v1082 = vpow.pop %v1081
        %v1083 = vmul.f32 %v1070, 1.442695
        %v1084 = vpow.pop %v1083
        %v1085 = vmul.f32 %v1071, 1.442695
        %v1086 = vpow.pop %v1085
        %v1087 = vmul.f32 %v1072, 1.442695
        %v1088 = vpow.pop %v1087
        %1097 = vrot.lane.b32.xlu0 %v1074, 96
        %v1098 = vpop.permute.xlu0 %1097
        %1099 = vrot.lane.b32.xlu0 %v1076, 96
        %v1100 = vpop.permute.xlu0 %1099
        %1101 = vrot.lane.b32.xlu0 %v1078, 96
        %v1102 = vpop.permute.xlu0 %1101
        %1103 = vrot.lane.b32.xlu0 %v1080, 96
        %v1104 = vpop.permute.xlu0 %1103
        %1105 = vrot.lane.b32.xlu0 %v1082, 96
        %v1106 = vpop.permute.xlu0 %1105
        %1107 = vrot.lane.b32.xlu0 %v1084, 96
        %v1108 = vpop.permute.xlu0 %1107
        %1109 = vrot.lane.b32.xlu0 %v1086, 96
        %v1110 = vpop.permute.xlu0 %1109
        %1111 = vrot.lane.b32.xlu0 %v1088, 96
        %v1112 = vpop.permute.xlu0 %1111
        %vm1121 = vcmask 64512
        %v1122 = vsel %vm1121, %v1098, 0.0
        %1123 = vadd.xlane.f32.xlu0 %v1122
        %v1124 = vpop.xlane.xlu0 %1123
        %v1125 = vsel %vm1121, %v1100, 0.0
        %1126 = vadd.xlane.f32.xlu0 %v1125
        %v1127 = vpop.xlane.xlu0 %1126
        %v1128 = vsel %vm1121, %v1102, 0.0
        %1129 = vadd.xlane.f32.xlu0 %v1128
        %v1130 = vpop.xlane.xlu0 %1129
        %v1131 = vsel %vm1121, %v1104, 0.0
        %1132 = vadd.xlane.f32.xlu0 %v1131
        %v1133 = vpop.xlane.xlu0 %1132
        %v1134 = vsel %vm1121, %v1106, 0.0
        %1135 = vadd.xlane.f32.xlu0 %v1134
        %v1136 = vpop.xlane.xlu0 %1135
        %v1137 = vsel %vm1121, %v1108, 0.0
        %1138 = vadd.xlane.f32.xlu0 %v1137
        %v1139 = vpop.xlane.xlu0 %1138
        %v1140 = vsel %vm1121, %v1110, 0.0
        %1141 = vadd.xlane.f32.xlu0 %v1140
        %v1142 = vpop.xlane.xlu0 %1141
        %v1143 = vsel %vm1121, %v1112, 0.0
        %1144 = vadd.xlane.f32.xlu0 %v1143
        %v1145 = vpop.xlane.xlu0 %1144
        %v1146 = vrcp.pop %v1124
        %v1147 = vrcp.pop %v1127
        %v1148 = vrcp.pop %v1130
        %v1149 = vrcp.pop %v1133
        %v1150 = vrcp.pop %v1136
        %v1151 = vrcp.pop %v1139
        %v1152 = vrcp.pop %v1142
        %v1153 = vrcp.pop %v1145
        %v1154 = vmul.f32 %v1074, %v1146
        %v1155 = vmul.f32 %v1076, %v1147
        %v1156 = vmul.f32 %v1078, %v1148
        %v1157 = vmul.f32 %v1080, %v1149
        %v1158 = vmul.f32 %v1082, %v1150
        %v1159 = vmul.f32 %v1084, %v1151
        %v1160 = vmul.f32 %v1086, %v1152
        %v1161 = vmul.f32 %v1088, %v1153
        %1162 = vrot.lane.b32.xlu0 %v739, 96
        %v1163 = vpop.permute.xlu0 %1162
        %1164 = vrot.lane.b32.xlu0 %v743, 96
        %v1165 = vpop.permute.xlu0 %1164
        %1166 = vrot.lane.b32.xlu0 %v747, 96
        %v1167 = vpop.permute.xlu0 %1166
        %1168 = vrot.lane.b32.xlu0 %v751, 96
        %v1169 = vpop.permute.xlu0 %1168
        %1170 = vrot.lane.b32.xlu0 %v755, 96
        %v1171 = vpop.permute.xlu0 %1170
        %1172 = vrot.lane.b32.xlu0 %v759, 96
        %v1173 = vpop.permute.xlu0 %1172
        %1174 = vrot.lane.b32.xlu0 %v763, 96
        %v1175 = vpop.permute.xlu0 %1174
        %1176 = vrot.lane.b32.xlu0 %v767, 96
        %v1177 = vpop.permute.xlu0 %1176
        %v1186 = vmul.f32 %v1154, %v1163
        %v1187 = vmul.f32 %v1155, %v1165
        %v1188 = vmul.f32 %v1156, %v1167
        %v1189 = vmul.f32 %v1157, %v1169
        %v1190 = vmul.f32 %v1158, %v1171
        %v1191 = vmul.f32 %v1159, %v1173
        %v1192 = vmul.f32 %v1160, %v1175
        %v1193 = vmul.f32 %v1161, %v1177
        %1202 = vrot.lane.b32.xlu0 %v1186, 96
        %v1203 = vpop.permute.xlu0 %1202
        %1204 = vrot.lane.b32.xlu0 %v1187, 96
        %v1205 = vpop.permute.xlu0 %1204
        %1206 = vrot.lane.b32.xlu0 %v1188, 96
        %v1207 = vpop.permute.xlu0 %1206
        %1208 = vrot.lane.b32.xlu0 %v1189, 96
        %v1209 = vpop.permute.xlu0 %1208
        %1210 = vrot.lane.b32.xlu0 %v1190, 96
        %v1211 = vpop.permute.xlu0 %1210
        %1212 = vrot.lane.b32.xlu0 %v1191, 96
        %v1213 = vpop.permute.xlu0 %1212
        %1214 = vrot.lane.b32.xlu0 %v1192, 96
        %v1215 = vpop.permute.xlu0 %1214
        %1216 = vrot.lane.b32.xlu0 %v1193, 96
        %v1217 = vpop.permute.xlu0 %1216
        %v1226 = vsel %vm1121, %v1203, 0.0
        %1227 = vadd.xlane.f32.xlu0 %v1226
        %v1228 = vpop.xlane.xlu0 %1227
        %v1229 = vsel %vm1121, %v1205, 0.0
        %1230 = vadd.xlane.f32.xlu0 %v1229
        %v1231 = vpop.xlane.xlu0 %1230
        %v1232 = vsel %vm1121, %v1207, 0.0
        %1233 = vadd.xlane.f32.xlu0 %v1232
        %v1234 = vpop.xlane.xlu0 %1233
        %v1235 = vsel %vm1121, %v1209, 0.0
        %1236 = vadd.xlane.f32.xlu0 %v1235
        %v1237 = vpop.xlane.xlu0 %1236
        %v1238 = vsel %vm1121, %v1211, 0.0
        %1239 = vadd.xlane.f32.xlu0 %v1238
        %v1240 = vpop.xlane.xlu0 %1239
        %v1241 = vsel %vm1121, %v1213, 0.0
        %1242 = vadd.xlane.f32.xlu0 %v1241
        %v1243 = vpop.xlane.xlu0 %1242
        %v1244 = vsel %vm1121, %v1215, 0.0
        %1245 = vadd.xlane.f32.xlu0 %v1244
        %v1246 = vpop.xlane.xlu0 %1245
        %v1247 = vsel %vm1121, %v1217, 0.0
        %1248 = vadd.xlane.f32.xlu0 %v1247
        %v1249 = vpop.xlane.xlu0 %1248
        %1250 = vrot.lane.b32.xlu0 %v739, 88
        %v1251 = vpop.permute.xlu0 %1250
        %1252 = vrot.lane.b32.xlu0 %v743, 88
        %v1253 = vpop.permute.xlu0 %1252
        %1254 = vrot.lane.b32.xlu0 %v747, 88
        %v1255 = vpop.permute.xlu0 %1254
        %1256 = vrot.lane.b32.xlu0 %v751, 88
        %v1257 = vpop.permute.xlu0 %1256
        %1258 = vrot.lane.b32.xlu0 %v755, 88
        %v1259 = vpop.permute.xlu0 %1258
        %1260 = vrot.lane.b32.xlu0 %v759, 88
        %v1261 = vpop.permute.xlu0 %1260
        %1262 = vrot.lane.b32.xlu0 %v763, 88
        %v1263 = vpop.permute.xlu0 %1262
        %1264 = vrot.lane.b32.xlu0 %v767, 88
        %v1265 = vpop.permute.xlu0 %1264
        %v1274 = vmul.f32 %v1154, %v1251
        %v1275 = vmul.f32 %v1155, %v1253
        %v1276 = vmul.f32 %v1156, %v1255
        %v1277 = vmul.f32 %v1157, %v1257
        %v1278 = vmul.f32 %v1158, %v1259
        %v1279 = vmul.f32 %v1159, %v1261
        %v1280 = vmul.f32 %v1160, %v1263
        %v1281 = vmul.f32 %v1161, %v1265
        %1290 = vrot.lane.b32.xlu0 %v1274, 96
        %v1291 = vpop.permute.xlu0 %1290
        %1292 = vrot.lane.b32.xlu0 %v1275, 96
        %v1293 = vpop.permute.xlu0 %1292
        %1294 = vrot.lane.b32.xlu0 %v1276, 96
        %v1295 = vpop.permute.xlu0 %1294
        %1296 = vrot.lane.b32.xlu0 %v1277, 96
        %v1297 = vpop.permute.xlu0 %1296
        %1298 = vrot.lane.b32.xlu0 %v1278, 96
        %v1299 = vpop.permute.xlu0 %1298
        %1300 = vrot.lane.b32.xlu0 %v1279, 96
        %v1301 = vpop.permute.xlu0 %1300
        %1302 = vrot.lane.b32.xlu0 %v1280, 96
        %v1303 = vpop.permute.xlu0 %1302
        %1304 = vrot.lane.b32.xlu0 %v1281, 96
        %v1305 = vpop.permute.xlu0 %1304
        %v1314 = vsel %vm1121, %v1291, 0.0
        %1315 = vadd.xlane.f32.xlu0 %v1314
        %v1316 = vpop.xlane.xlu0 %1315
        %v1317 = vsel %vm1121, %v1293, 0.0
        %1318 = vadd.xlane.f32.xlu0 %v1317
        %v1319 = vpop.xlane.xlu0 %1318
        %v1320 = vsel %vm1121, %v1295, 0.0
        %1321 = vadd.xlane.f32.xlu0 %v1320
        %v1322 = vpop.xlane.xlu0 %1321
        %v1323 = vsel %vm1121, %v1297, 0.0
        %1324 = vadd.xlane.f32.xlu0 %v1323
        %v1325 = vpop.xlane.xlu0 %1324
        %v1326 = vsel %vm1121, %v1299, 0.0
        %1327 = vadd.xlane.f32.xlu0 %v1326
        %v1328 = vpop.xlane.xlu0 %1327
        %v1329 = vsel %vm1121, %v1301, 0.0
        %1330 = vadd.xlane.f32.xlu0 %v1329
        %v1331 = vpop.xlane.xlu0 %1330
        %v1332 = vsel %vm1121, %v1303, 0.0
        %1333 = vadd.xlane.f32.xlu0 %v1332
        %v1334 = vpop.xlane.xlu0 %1333
        %v1335 = vsel %vm1121, %v1305, 0.0
        %1336 = vadd.xlane.f32.xlu0 %v1335
        %v1337 = vpop.xlane.xlu0 %1336
        %1338 = vrot.lane.b32.xlu0 %v739, 80
        %v1339 = vpop.permute.xlu0 %1338
        %1340 = vrot.lane.b32.xlu0 %v743, 80
        %v1341 = vpop.permute.xlu0 %1340
        %1342 = vrot.lane.b32.xlu0 %v747, 80
        %v1343 = vpop.permute.xlu0 %1342
        %1344 = vrot.lane.b32.xlu0 %v751, 80
        %v1345 = vpop.permute.xlu0 %1344
        %1346 = vrot.lane.b32.xlu0 %v755, 80
        %v1347 = vpop.permute.xlu0 %1346
        %1348 = vrot.lane.b32.xlu0 %v759, 80
        %v1349 = vpop.permute.xlu0 %1348
        %1350 = vrot.lane.b32.xlu0 %v763, 80
        %v1351 = vpop.permute.xlu0 %1350
        %1352 = vrot.lane.b32.xlu0 %v767, 80
        %v1353 = vpop.permute.xlu0 %1352
        %v1362 = vmul.f32 %v1154, %v1339
        %v1363 = vmul.f32 %v1155, %v1341
        %v1364 = vmul.f32 %v1156, %v1343
        %v1365 = vmul.f32 %v1157, %v1345
        %v1366 = vmul.f32 %v1158, %v1347
        %v1367 = vmul.f32 %v1159, %v1349
        %v1368 = vmul.f32 %v1160, %v1351
        %v1369 = vmul.f32 %v1161, %v1353
        %1378 = vrot.lane.b32.xlu0 %v1362, 96
        %v1379 = vpop.permute.xlu0 %1378
        %1380 = vrot.lane.b32.xlu0 %v1363, 96
        %v1381 = vpop.permute.xlu0 %1380
        %1382 = vrot.lane.b32.xlu0 %v1364, 96
        %v1383 = vpop.permute.xlu0 %1382
        %1384 = vrot.lane.b32.xlu0 %v1365, 96
        %v1385 = vpop.permute.xlu0 %1384
        %1386 = vrot.lane.b32.xlu0 %v1366, 96
        %v1387 = vpop.permute.xlu0 %1386
        %1388 = vrot.lane.b32.xlu0 %v1367, 96
        %v1389 = vpop.permute.xlu0 %1388
        %1390 = vrot.lane.b32.xlu0 %v1368, 96
        %v1391 = vpop.permute.xlu0 %1390
        %1392 = vrot.lane.b32.xlu0 %v1369, 96
        %v1393 = vpop.permute.xlu0 %1392
        %v1402 = vsel %vm1121, %v1379, 0.0
        %1403 = vadd.xlane.f32.xlu0 %v1402
        %v1404 = vpop.xlane.xlu0 %1403
        %v1405 = vsel %vm1121, %v1381, 0.0
        %1406 = vadd.xlane.f32.xlu0 %v1405
        %v1407 = vpop.xlane.xlu0 %1406
        %v1408 = vsel %vm1121, %v1383, 0.0
        %1409 = vadd.xlane.f32.xlu0 %v1408
        %v1410 = vpop.xlane.xlu0 %1409
        %v1411 = vsel %vm1121, %v1385, 0.0
        %1412 = vadd.xlane.f32.xlu0 %v1411
        %v1413 = vpop.xlane.xlu0 %1412
        %v1414 = vsel %vm1121, %v1387, 0.0
        %1415 = vadd.xlane.f32.xlu0 %v1414
        %v1416 = vpop.xlane.xlu0 %1415
        %v1417 = vsel %vm1121, %v1389, 0.0
        %1418 = vadd.xlane.f32.xlu0 %v1417
        %v1419 = vpop.xlane.xlu0 %1418
        %v1420 = vsel %vm1121, %v1391, 0.0
        %1421 = vadd.xlane.f32.xlu0 %v1420
        %v1422 = vpop.xlane.xlu0 %1421
        %v1423 = vsel %vm1121, %v1393, 0.0
        %1424 = vadd.xlane.f32.xlu0 %v1423
        %v1425 = vpop.xlane.xlu0 %1424
        %1426 = vrot.lane.b32.xlu0 %v739, 72
        %v1427 = vpop.permute.xlu0 %1426
        %1428 = vrot.lane.b32.xlu0 %v743, 72
        %v1429 = vpop.permute.xlu0 %1428
        %1430 = vrot.lane.b32.xlu0 %v747, 72
        %v1431 = vpop.permute.xlu0 %1430
        %1432 = vrot.lane.b32.xlu0 %v751, 72
        %v1433 = vpop.permute.xlu0 %1432
        %1434 = vrot.lane.b32.xlu0 %v755, 72
        %v1435 = vpop.permute.xlu0 %1434
        %1436 = vrot.lane.b32.xlu0 %v759, 72
        %v1437 = vpop.permute.xlu0 %1436
        %1438 = vrot.lane.b32.xlu0 %v763, 72
        %v1439 = vpop.permute.xlu0 %1438
        %1440 = vrot.lane.b32.xlu0 %v767, 72
        %v1441 = vpop.permute.xlu0 %1440
        %v1450 = vmul.f32 %v1154, %v1427
        %v1451 = vmul.f32 %v1155, %v1429
        %v1452 = vmul.f32 %v1156, %v1431
        %v1453 = vmul.f32 %v1157, %v1433
        %v1454 = vmul.f32 %v1158, %v1435
        %v1455 = vmul.f32 %v1159, %v1437
        %v1456 = vmul.f32 %v1160, %v1439
        %v1457 = vmul.f32 %v1161, %v1441
        %1466 = vrot.lane.b32.xlu0 %v1450, 96
        %v1467 = vpop.permute.xlu0 %1466
        %1468 = vrot.lane.b32.xlu0 %v1451, 96
        %v1469 = vpop.permute.xlu0 %1468
        %1470 = vrot.lane.b32.xlu0 %v1452, 96
        %v1471 = vpop.permute.xlu0 %1470
        %1472 = vrot.lane.b32.xlu0 %v1453, 96
        %v1473 = vpop.permute.xlu0 %1472
        %1474 = vrot.lane.b32.xlu0 %v1454, 96
        %v1475 = vpop.permute.xlu0 %1474
        %1476 = vrot.lane.b32.xlu0 %v1455, 96
        %v1477 = vpop.permute.xlu0 %1476
        %1478 = vrot.lane.b32.xlu0 %v1456, 96
        %v1479 = vpop.permute.xlu0 %1478
        %1480 = vrot.lane.b32.xlu0 %v1457, 96
        %v1481 = vpop.permute.xlu0 %1480
        %v1490 = vsel %vm1121, %v1467, 0.0
        %1491 = vadd.xlane.f32.xlu0 %v1490
        %v1492 = vpop.xlane.xlu0 %1491
        %v1493 = vsel %vm1121, %v1469, 0.0
        %1494 = vadd.xlane.f32.xlu0 %v1493
        %v1495 = vpop.xlane.xlu0 %1494
        %v1496 = vsel %vm1121, %v1471, 0.0
        %1497 = vadd.xlane.f32.xlu0 %v1496
        %v1498 = vpop.xlane.xlu0 %1497
        %v1499 = vsel %vm1121, %v1473, 0.0
        %1500 = vadd.xlane.f32.xlu0 %v1499
        %v1501 = vpop.xlane.xlu0 %1500
        %v1502 = vsel %vm1121, %v1475, 0.0
        %1503 = vadd.xlane.f32.xlu0 %v1502
        %v1504 = vpop.xlane.xlu0 %1503
        %v1505 = vsel %vm1121, %v1477, 0.0
        %1506 = vadd.xlane.f32.xlu0 %v1505
        %v1507 = vpop.xlane.xlu0 %1506
        %v1508 = vsel %vm1121, %v1479, 0.0
        %1509 = vadd.xlane.f32.xlu0 %v1508
        %v1510 = vpop.xlane.xlu0 %1509
        %v1511 = vsel %vm1121, %v1481, 0.0
        %1512 = vadd.xlane.f32.xlu0 %v1511
        %v1513 = vpop.xlane.xlu0 %1512
        %v1522 = vlaneseq
        %v1523 = vand.u32 %v1522, 127
        %v1524 = vlaneseq
        %v1525 = vshrl.u32 %v1524, 7
        %v1526 = vsub.s32 %v1523, %v1525
        %v1527 = vrot.slane %v1228, %v1526
        %v1528 = vlaneseq
        %v1529 = vshrl.u32 %v1528, 7
        %v1530 = vsub.s32 %v1523, %v1529
        %v1531 = vrot.slane %v1231, %v1530
        %v1532 = vlaneseq
        %v1533 = vshrl.u32 %v1532, 7
        %v1534 = vsub.s32 %v1523, %v1533
        %v1535 = vrot.slane %v1234, %v1534
        %v1536 = vlaneseq
        %v1537 = vshrl.u32 %v1536, 7
        %v1538 = vsub.s32 %v1523, %v1537
        %v1539 = vrot.slane %v1237, %v1538
        %v1540 = vlaneseq
        %v1541 = vshrl.u32 %v1540, 7
        %v1542 = vsub.s32 %v1523, %v1541
        %v1543 = vrot.slane %v1240, %v1542
        %v1544 = vlaneseq
        %v1545 = vshrl.u32 %v1544, 7
        %v1546 = vsub.s32 %v1523, %v1545
        %v1547 = vrot.slane %v1243, %v1546
        %v1548 = vlaneseq
        %v1549 = vshrl.u32 %v1548, 7
        %v1550 = vsub.s32 %v1523, %v1549
        %v1551 = vrot.slane %v1246, %v1550
        %v1552 = vlaneseq
        %v1553 = vshrl.u32 %v1552, 7
        %v1554 = vsub.s32 %v1523, %v1553
        %v1555 = vrot.slane %v1249, %v1554
        %vm1556 = vcmask 1041409
        %v1557 = vsel %vm1556, %v1531, %v1527
        %vm1558 = vcmask 1042434
        %v1559 = vsel %vm1558, %v1535, %v1557
        %vm1560 = vcmask 1043459
        %v1561 = vsel %vm1560, %v1539, %v1559
        %vm1562 = vcmask 1044484
        %v1563 = vsel %vm1562, %v1543, %v1561
        %vm1564 = vcmask 1045509
        %v1565 = vsel %vm1564, %v1547, %v1563
        %vm1566 = vcmask 1046534
        %v1567 = vsel %vm1566, %v1551, %v1565
        %vm1568 = vcmask 1047559
        %v1569 = vsel %vm1568, %v1555, %v1567
        %v1579 = vadd.s32 %v1523, 4294967288
        %v1580 = vlaneseq
        %v1581 = vshrl.u32 %v1580, 7
        %v1582 = vsub.s32 %v1579, %v1581
        %v1583 = vrot.slane %v1316, %v1582
        %v1584 = vlaneseq
        %v1585 = vshrl.u32 %v1584, 7
        %v1586 = vsub.s32 %v1579, %v1585
        %v1587 = vrot.slane %v1319, %v1586
        %v1588 = vlaneseq
        %v1589 = vshrl.u32 %v1588, 7
        %v1590 = vsub.s32 %v1579, %v1589
        %v1591 = vrot.slane %v1322, %v1590
        %v1592 = vlaneseq
        %v1593 = vshrl.u32 %v1592, 7
        %v1594 = vsub.s32 %v1579, %v1593
        %v1595 = vrot.slane %v1325, %v1594
        %v1596 = vlaneseq
        %v1597 = vshrl.u32 %v1596, 7
        %v1598 = vsub.s32 %v1579, %v1597
        %v1599 = vrot.slane %v1328, %v1598
        %v1600 = vlaneseq
        %v1601 = vshrl.u32 %v1600, 7
        %v1602 = vsub.s32 %v1579, %v1601
        %v1603 = vrot.slane %v1331, %v1602
        %v1604 = vlaneseq
        %v1605 = vshrl.u32 %v1604, 7
        %v1606 = vsub.s32 %v1579, %v1605
        %v1607 = vrot.slane %v1334, %v1606
        %v1608 = vlaneseq
        %v1609 = vshrl.u32 %v1608, 7
        %v1610 = vsub.s32 %v1579, %v1609
        %v1611 = vrot.slane %v1337, %v1610
        %v1612 = vsel %vm1556, %v1587, %v1583
        %v1613 = vsel %vm1558, %v1591, %v1612
        %v1614 = vsel %vm1560, %v1595, %v1613
        %v1615 = vsel %vm1562, %v1599, %v1614
        %v1616 = vsel %vm1564, %v1603, %v1615
        %v1617 = vsel %vm1566, %v1607, %v1616
        %v1618 = vsel %vm1568, %v1611, %v1617
        %v1628 = vadd.s32 %v1523, 4294967280
        %v1629 = vlaneseq
        %v1630 = vshrl.u32 %v1629, 7
        %v1631 = vsub.s32 %v1628, %v1630
        %v1632 = vrot.slane %v1404, %v1631
        %v1633 = vlaneseq
        %v1634 = vshrl.u32 %v1633, 7
        %v1635 = vsub.s32 %v1628, %v1634
        %v1636 = vrot.slane %v1407, %v1635
        %v1637 = vlaneseq
        %v1638 = vshrl.u32 %v1637, 7
        %v1639 = vsub.s32 %v1628, %v1638
        %v1640 = vrot.slane %v1410, %v1639
        %v1641 = vlaneseq
        %v1642 = vshrl.u32 %v1641, 7
        %v1643 = vsub.s32 %v1628, %v1642
        %v1644 = vrot.slane %v1413, %v1643
        %v1645 = vlaneseq
        %v1646 = vshrl.u32 %v1645, 7
        %v1647 = vsub.s32 %v1628, %v1646
        %v1648 = vrot.slane %v1416, %v1647
        %v1649 = vlaneseq
        %v1650 = vshrl.u32 %v1649, 7
        %v1651 = vsub.s32 %v1628, %v1650
        %v1652 = vrot.slane %v1419, %v1651
        %v1653 = vlaneseq
        %v1654 = vshrl.u32 %v1653, 7
        %v1655 = vsub.s32 %v1628, %v1654
        %v1656 = vrot.slane %v1422, %v1655
        %v1657 = vlaneseq
        %v1658 = vshrl.u32 %v1657, 7
        %v1659 = vsub.s32 %v1628, %v1658
        %v1660 = vrot.slane %v1425, %v1659
        %v1661 = vsel %vm1556, %v1636, %v1632
        %v1662 = vsel %vm1558, %v1640, %v1661
        %v1663 = vsel %vm1560, %v1644, %v1662
        %v1664 = vsel %vm1562, %v1648, %v1663
        %v1665 = vsel %vm1564, %v1652, %v1664
        %v1666 = vsel %vm1566, %v1656, %v1665
        %v1667 = vsel %vm1568, %v1660, %v1666
        %v1677 = vadd.s32 %v1523, 4294967272
        %v1678 = vlaneseq
        %v1679 = vshrl.u32 %v1678, 7
        %v1680 = vsub.s32 %v1677, %v1679
        %v1681 = vrot.slane %v1492, %v1680
        %v1682 = vlaneseq
        %v1683 = vshrl.u32 %v1682, 7
        %v1684 = vsub.s32 %v1677, %v1683
        %v1685 = vrot.slane %v1495, %v1684
        %v1686 = vlaneseq
        %v1687 = vshrl.u32 %v1686, 7
        %v1688 = vsub.s32 %v1677, %v1687
        %v1689 = vrot.slane %v1498, %v1688
        %v1690 = vlaneseq
        %v1691 = vshrl.u32 %v1690, 7
        %v1692 = vsub.s32 %v1677, %v1691
        %v1693 = vrot.slane %v1501, %v1692
        %v1694 = vlaneseq
        %v1695 = vshrl.u32 %v1694, 7
        %v1696 = vsub.s32 %v1677, %v1695
        %v1697 = vrot.slane %v1504, %v1696
        %v1698 = vlaneseq
        %v1699 = vshrl.u32 %v1698, 7
        %v1700 = vsub.s32 %v1677, %v1699
        %v1701 = vrot.slane %v1507, %v1700
        %v1702 = vlaneseq
        %v1703 = vshrl.u32 %v1702, 7
        %v1704 = vsub.s32 %v1677, %v1703
        %v1705 = vrot.slane %v1510, %v1704
        %v1706 = vlaneseq
        %v1707 = vshrl.u32 %v1706, 7
        %v1708 = vsub.s32 %v1677, %v1707
        %v1709 = vrot.slane %v1513, %v1708
        %v1710 = vsel %vm1556, %v1685, %v1681
        %v1711 = vsel %vm1558, %v1689, %v1710
        %v1712 = vsel %vm1560, %v1693, %v1711
        %v1713 = vsel %vm1562, %v1697, %v1712
        %v1714 = vsel %vm1564, %v1701, %v1713
        %v1715 = vsel %vm1566, %v1705, %v1714
        %v1716 = vsel %vm1568, %v1709, %v1715
        %v1718 = vsel %vm1121, %v1569, %v1618
        %vm1719 = vcmask 130048
        %v1720 = vsel %vm1719, %v1718, %v1667
        %vm1721 = vcmask 195584
        %v1722 = vsel %vm1721, %v1720, %v1716
        %v1723 = vld [vmem:[%s470] sm:$0xf]
        %v1724 = vld [vmem:[%s470 + $0x4] sm:$0xf]
        %v1725 = vld [vmem:[%s470 + $0x8] sm:$0xf]
        %v1726 = vld [vmem:[%s470 + $0xc] sm:$0xf]
        %v1727 = vpack.c.bf16 %v1722, %v1722
        %v1728 = vld [vmem:[%s543] sm:$0x1]
        %v1730 = vlaneseq
        %v1731 = vshrl.u32 %v1730, 7
        %v1732 = vsub.s32 0, %v1731
        %v1733 = vrot.slane %v1728, %v1732
        %v1739 = vunpack.c.l.b16 %v1723
        %v1740 = vunpack.c.l.b16 %v1724
        %v1741 = vunpack.c.l.b16 %v1725
        %v1742 = vunpack.c.l.b16 %v1726
        %v1743 = vpack.c.b16 %v1740, %v1739
        %v1744 = vpack.c.b16 %v1742, %v1741
        %v1748 = vsel %vm586, %v1727, 0
        %1750 = vmatprep.subr.bf16.mxu0 0
        %1751 = vmatpush1.bf16.msra.mxu0 %v1743
        %1752 = vmatprep.subr.bf16.mxu0 0
        %1753 = vmatpush1.bf16.msra.mxu0 %v1744
        %1754 = vmatprep.subr.bf16.mxu0 0
        %1755 = vmatpush1.bf16.msra.mxu0 0
        %1756 = vmatprep.subr.bf16.mxu0 0
        %1757 = vmatpush1.bf16.msra.mxu0 0
        %1758 = vmatprep.subr.bf16.mxu0 0
        %1759 = vmatpush1.bf16.msra.mxu0 0
        %1760 = vmatprep.subr.bf16.mxu0 0
        %1761 = vmatpush1.bf16.msra.mxu0 0
        %1762 = vmatprep.subr.bf16.mxu0 0
        %1763 = vmatpush1.bf16.msra.mxu0 0
        %1764 = vmatprep.subr.bf16.mxu0 0
        %1765 = vmatpush1.bf16.msra.mxu0 0
        %1766 = vmatprep.subr.bf16.mxu0 0
        %1767 = vmatpush1.bf16.msra.mxu0 0
        %1768 = vmatprep.subr.bf16.mxu0 0
        %1769 = vmatpush1.bf16.msra.mxu0 0
        %1770 = vmatprep.subr.bf16.mxu0 0
        %1771 = vmatpush1.bf16.msra.mxu0 0
        %1772 = vmatprep.subr.bf16.mxu0 0
        %1773 = vmatpush1.bf16.msra.mxu0 0
        %1774 = vmatprep.subr.bf16.mxu0 0
        %1775 = vmatpush1.bf16.msra.mxu0 0
        %1776 = vmatprep.subr.bf16.mxu0 0
        %1777 = vmatpush1.bf16.msra.mxu0 0
        %1778 = vmatprep.subr.bf16.mxu0 0
        %1779 = vmatpush1.bf16.msra.mxu0 0
        %1780 = vmatprep.subr.bf16.mxu0 0
        %1781 = vmatpush1.bf16.msra.mxu0 0
        %1782 = vmatprep.mubr.bf16.mxu0 0
        %1783 = vmatmul.mubr.bf16.gmra.mrb[0].mxu0 %v1748
        %v1784 = vpop.f32.mrb[0].mxu0
        %v1785 = vadd.f32 %v1733, %v1784
        %v1786 = vpop.f32.mrb[0].mxu0
        %v1787 = vpop.f32.mrb[0].mxu0
        %v1788 = vpop.f32.mrb[0].mxu0
        %1789 = vdwg.mxu0
        %1790 = vrot.lane.b32.xlu0 %v625, 32
        %v1791 = vpop.permute.xlu0 %1790
        %v1793 = vadd.f32 %v1785, %v1791
        %v1794 = vsel %vm586, %v1793, 0.0
        %1795 = vadd.xlane.f32.xlu0 %v1794
        %v1796 = vpop.xlane.xlu0 %1795
        %v1797 = vmul.f32 %v1793, %v1793
        %v1798 = vsel %vm586, %v1797, 0.0
        %1799 = vadd.xlane.f32.xlu0 %v1798
        %v1800 = vpop.xlane.xlu0 %1799
        %v1801 = vmul.f32 %v1796, 0.03125
        %v1802 = vmul.f32 %v1800, 0.03125
        %v1803 = vmul.f32 %v1801, %v1801
        %v1804 = vsub.f32 %v1802, %v1803
        %v1805 = vmax.f32 %v1804, 0.0
        %v1806 = vsub.f32 %v1793, %v1801
        %v1807 = vadd.f32 %v1805, 1e-12
        %v1808 = vrsqrt.pop %v1807
        %v1809 = vmul.f32 %v1806, %v1808
        %v1810 = vld [vmem:[%s546] sm:$0x1]
        %v1812 = vlaneseq
        %v1813 = vshrl.u32 %v1812, 7
        %v1814 = vsub.s32 0, %v1813
        %v1815 = vrot.slane %v1810, %v1814
        %v1817 = vmul.f32 %v1815, %v1809
        %v1818 = vld [vmem:[%s549] sm:$0x1]
        %v1820 = vlaneseq
        %v1821 = vshrl.u32 %v1820, 7
        %v1822 = vsub.s32 0, %v1821
        %v1823 = vrot.slane %v1818, %v1822
        %v1825 = vadd.f32 %v1817, %v1823
        %v1826 = vld [vmem:[%s479] sm:$0xf]
        %v1827 = vld [vmem:[%s479 + $0x4] sm:$0xf]
        %v1828 = vld [vmem:[%s479 + $0x8] sm:$0xf]
        %v1829 = vld [vmem:[%s479 + $0xc] sm:$0xf]
        %v1830 = vpack.c.bf16 %v1825, %v1825
        %v1831 = vld [vmem:[%s552] sm:$0x1]
        %v1833 = vlaneseq
        %v1834 = vshrl.u32 %v1833, 7
        %v1835 = vsub.s32 0, %v1834
        %v1836 = vrot.slane %v1831, %v1835
        %v1842 = vunpack.c.l.b16 %v1826
        %v1843 = vunpack.c.l.b16 %v1827
        %v1844 = vunpack.c.l.b16 %v1828
        %v1845 = vunpack.c.l.b16 %v1829
        %v1846 = vpack.c.b16 %v1843, %v1842
        %v1847 = vpack.c.b16 %v1845, %v1844
        %v1851 = vsel %vm586, %v1830, 0
        %1853 = vmatprep.subr.bf16.mxu0 0
        %1854 = vmatpush1.bf16.msra.mxu0 %v1846
        %1855 = vmatprep.subr.bf16.mxu0 0
        %1856 = vmatpush1.bf16.msra.mxu0 %v1847
        %1857 = vmatprep.subr.bf16.mxu0 0
        %1858 = vmatpush1.bf16.msra.mxu0 0
        %1859 = vmatprep.subr.bf16.mxu0 0
        %1860 = vmatpush1.bf16.msra.mxu0 0
        %1861 = vmatprep.subr.bf16.mxu0 0
        %1862 = vmatpush1.bf16.msra.mxu0 0
        %1863 = vmatprep.subr.bf16.mxu0 0
        %1864 = vmatpush1.bf16.msra.mxu0 0
        %1865 = vmatprep.subr.bf16.mxu0 0
        %1866 = vmatpush1.bf16.msra.mxu0 0
        %1867 = vmatprep.subr.bf16.mxu0 0
        %1868 = vmatpush1.bf16.msra.mxu0 0
        %1869 = vmatprep.subr.bf16.mxu0 0
        %1870 = vmatpush1.bf16.msra.mxu0 0
        %1871 = vmatprep.subr.bf16.mxu0 0
        %1872 = vmatpush1.bf16.msra.mxu0 0
        %1873 = vmatprep.subr.bf16.mxu0 0
        %1874 = vmatpush1.bf16.msra.mxu0 0
        %1875 = vmatprep.subr.bf16.mxu0 0
        %1876 = vmatpush1.bf16.msra.mxu0 0
        %1877 = vmatprep.subr.bf16.mxu0 0
        %1878 = vmatpush1.bf16.msra.mxu0 0
        %1879 = vmatprep.subr.bf16.mxu0 0
        %1880 = vmatpush1.bf16.msra.mxu0 0
        %1881 = vmatprep.subr.bf16.mxu0 0
        %1882 = vmatpush1.bf16.msra.mxu0 0
        %1883 = vmatprep.subr.bf16.mxu0 0
        %1884 = vmatpush1.bf16.msra.mxu0 0
        %1885 = vmatprep.mubr.bf16.mxu0 0
        %1886 = vmatmul.mubr.bf16.gmra.mrb[0].mxu0 %v1851
        %v1887 = vpop.f32.mrb[0].mxu0
        %v1888 = vadd.f32 %v1836, %v1887
        %v1889 = vpop.f32.mrb[0].mxu0
        %v1890 = vpop.f32.mrb[0].mxu0
        %v1891 = vpop.f32.mrb[0].mxu0
        %1892 = vdwg.mxu0
        %v1893 = vadd.f32 %v1888, %v554
        %1894 = vst.msk [vmem:[#allocation2] sm:$0xff] %vm586, %v1893
        %p1895 = scmp.eq.s32.totalorder %s30, 1
        // Predicated region
        $region85: #{decoder_forward.1} parent=63 // pred_check
          %p1896 = pneg %p1895
        $region86: #{decoder_forward.1} parent=63 // pred_check_branch
          %1898 = sbr.rel (%p1896) target = $region88
        $region87: #{decoder_forward.1} parent=63 // pred_region
          %v1899 = vld [vmem:[%s9] sm:$0xf]
          %v1900 = vld [vmem:[%s9 + $0x4] sm:$0xf]
          %v1901 = vld [vmem:[%s9 + $0x8] sm:$0xf]
          %v1902 = vld [vmem:[%s9 + $0xc] sm:$0xf]
          %v1903 = vpack.c.bf16 %v1893, %v1893
          %v1904 = vld [vmem:[%s10] sm:$0x1]
          %v1906 = vlaneseq
          %v1907 = vshrl.u32 %v1906, 7
          %v1908 = vsub.s32 0, %v1907
          %v1909 = vrot.slane %v1904, %v1908
          %v1915 = vunpack.c.l.b16 %v1899
          %v1916 = vunpack.c.l.b16 %v1900
          %v1917 = vunpack.c.l.b16 %v1901
          %v1918 = vunpack.c.l.b16 %v1902
          %v1919 = vpack.c.b16 %v1916, %v1915
          %v1920 = vpack.c.b16 %v1918, %v1917
          %v1924 = vsel %vm586, %v1903, 0
          %1926 = vmatprep.subr.bf16.mxu0 0
          %1927 = vmatpush1.bf16.msra.mxu0 %v1919
          %1928 = vmatprep.subr.bf16.mxu0 0
          %1929 = vmatpush1.bf16.msra.mxu0 %v1920
          %1930 = vmatprep.subr.bf16.mxu0 0
          %1931 = vmatpush1.bf16.msra.mxu0 0
          %1932 = vmatprep.subr.bf16.mxu0 0
          %1933 = vmatpush1.bf16.msra.mxu0 0
          %1934 = vmatprep.subr.bf16.mxu0 0
          %1935 = vmatpush1.bf16.msra.mxu0 0
          %1936 = vmatprep.subr.bf16.mxu0 0
          %1937 = vmatpush1.bf16.msra.mxu0 0
          %1938 = vmatprep.subr.bf16.mxu0 0
          %1939 = vmatpush1.bf16.msra.mxu0 0
          %1940 = vmatprep.subr.bf16.mxu0 0
          %1941 = vmatpush1.bf16.msra.mxu0 0
          %1942 = vmatprep.subr.bf16.mxu0 0
          %1943 = vmatpush1.bf16.msra.mxu0 0
          %1944 = vmatprep.subr.bf16.mxu0 0
          %1945 = vmatpush1.bf16.msra.mxu0 0
          %1946 = vmatprep.subr.bf16.mxu0 0
          %1947 = vmatpush1.bf16.msra.mxu0 0
          %1948 = vmatprep.subr.bf16.mxu0 0
          %1949 = vmatpush1.bf16.msra.mxu0 0
          %1950 = vmatprep.subr.bf16.mxu0 0
          %1951 = vmatpush1.bf16.msra.mxu0 0
          %1952 = vmatprep.subr.bf16.mxu0 0
          %1953 = vmatpush1.bf16.msra.mxu0 0
          %1954 = vmatprep.subr.bf16.mxu0 0
          %1955 = vmatpush1.bf16.msra.mxu0 0
          %1956 = vmatprep.subr.bf16.mxu0 0
          %1957 = vmatpush1.bf16.msra.mxu0 0
          %1958 = vmatprep.mubr.bf16.mxu0 0
          %1959 = vmatmul.mubr.bf16.gmra.mrb[0].mxu0 %v1924
          %v1960 = vpop.f32.mrb[0].mxu0
          %v1961 = vadd.f32 %v1909, %v1960
          %v1962 = vpop.f32.mrb[0].mxu0
          %v1963 = vpop.f32.mrb[0].mxu0
          %v1964 = vpop.f32.mrb[0].mxu0
          %1965 = vdwg.mxu0
          %1966 = vst [vmem:[#allocation11] sm:$0xff] %v1961
        $region88: #{decoder_forward.1} parent=63 // pred_fallthru
          _
        // Predicated region
        $region89: #{decoder_forward.1} parent=63 // pred_check
          %p1967 = pneg %p314
        $region90: #{decoder_forward.1} parent=63 // pred_check_branch
          %1969 = sbr.rel (%p1967) target = $region92
        $region91: #{decoder_forward.1} parent=63 // pred_region
          %s1971 = ssub.s32 128, 128
          %1972 = vsyncadd [#allocation5], %s1971
          %s1974 = sshll.u32 [#allocation11], 4
          %s1975 = int_to_ptr.vmem [resolvable:$true] %s1974
          %1977 = dma.vmem_to_hbm [thread:$0]  %s1975, 128, %s11, [#allocation5]
        $region92: #{decoder_forward.1} parent=63 // pred_fallthru
          _
        // Predicated region
        $region93: #{decoder_forward.1} parent=63 // pred_check
          %p1978 = pneg %p314
        $region94: #{decoder_forward.1} parent=63 // pred_check_branch
          %1980 = sbr.rel (%p1978) target = $region96
        $region95: #{decoder_forward.1} parent=63 // pred_region
          %1981 = dma.done [#allocation5], 128
        $region96: #{decoder_forward.1} parent=63 // pred_fallthru
          _
      $region64: #{decoder_forward.1} parent=5 // pred_fallthru
        _
      %p1982 = scmp.le.s32.totalorder 2, %s25
      // Predicated region
      $region97: #{decoder_forward.1} parent=5 // pred_check
        %p1983 = pneg %p1982
      $region98: #{decoder_forward.1} parent=5 // pred_check_branch
        %1985 = sbr.rel (%p1983) target = $region100
      $region99: #{decoder_forward.1} parent=5 // pred_region
        %s1986 = ssub.s32 %s25, 2
      $region100: #{decoder_forward.1} parent=5 // pred_fallthru
        _
    $region6: #{decoder_forward.1} parent=1 // loop_footer
      %s29 = sadd.s32 1, %s25
    $region7: #{decoder_forward.1} parent=1 // loop_footer_branch
      %24 = sbr.rel target = $region3
    $region8: #{decoder_forward.1} parent=1 // loop_exit
      _
    %1987 = vsyncpa [#allocation4], 1
    %s1988 = scalar_lea.sflag [#allocation4], 1
    %1989 = vsyncpa %s1988, 1
    %1990 = vsyncpa [#allocation7], 1
    %s1991 = scalar_lea.sflag [#allocation7], 1
    %1992 = vsyncpa %s1991, 1
    %1993 = vsyncpa [#allocation10], 1
    %s1994 = scalar_lea.sflag [#allocation10], 1
    %1995 = vsyncpa %s1994, 1
    %1996 = vsyncpa [#allocation5], 1
    %s1997 = scalar_lea.sflag [#allocation5], 1
    %1998 = vsyncpa %s1997, 1

</llo_original>
